<compile_context>
chip_gen: v6e
topology: v6e:2x2x1
jax: 0.10.0
libtpu: 0.0.40
codegen_flags: <defaults>
</compile_context>

<pallas_src>
import functools

import jax
import jax.numpy as jnp
import numpy as np
from jax import lax
from jax.experimental import pallas as pl
from jax.experimental.pallas import tpu as pltpu


def _round_up(x, m):
    return (x + m - 1) // m * m


def _layout_dims(cin, ch):
    """Padded channel / contraction sizes shared by weight prep and the kernel."""
    cin_p = _round_up(cin, 8)              # sublane-align the x channel block
    ch_p = _round_up(ch, 8)                # sublane-align the h channel block
    c_p = cin_p + ch_p
    k_pad = _round_up(9 * c_p + 1, 128)    # 9 taps + 1 bias row, lane-dense K
    return cin_p, ch_p, c_p, k_pad


def prepare_conv_params(w_oihw, bias, compute_dtype=jnp.float32):
    """Conv2d (OIHW) weight + bias -> transposed, channel-padded, bias-folded
    matmul operand of shape (4*Ch, K_pad).  Hoisted out of the per-step path.

    K-axis layout: 9 taps (ky major, kx minor), each a C_p-wide channel block
    [x(0..Cin-1), zero pad, h(0..Ch-1), zero pad]; then one bias column (matched
    by a constant-1 row in the in-kernel im2col); then zero columns up to K_pad.
    """
    O, Ctot, KH, KW = w_oihw.shape
    assert (KH, KW) == (3, 3), "ConvLSTMcell kernel_size is fixed to 3x3 here"
    Ch = O // 4
    Cin = Ctot - Ch
    cin_p, ch_p, c_p, k_pad = _layout_dims(Cin, Ch)

    w_x = jnp.pad(w_oihw[:, :Cin], ((0, 0), (0, cin_p - Cin), (0, 0), (0, 0)))
    w_h = jnp.pad(w_oihw[:, Cin:], ((0, 0), (0, ch_p - Ch), (0, 0), (0, 0)))
    w_cat = jnp.concatenate([w_x, w_h], axis=1)              # (O, C_p, 3, 3)
    w_t = jnp.transpose(w_cat, (0, 2, 3, 1)).reshape(O, 9 * c_p)
    pieces = [w_t, bias.reshape(O, 1).astype(w_t.dtype)]
    if k_pad > 9 * c_p + 1:
        pieces.append(jnp.zeros((O, k_pad - 9 * c_p - 1), w_t.dtype))
    w_full = jnp.concatenate(pieces, axis=1)                 # (O, K_pad)
    return w_full.astype(compute_dtype)


def _convlstm_kernel(x_ref, h_ref, c_ref, w_ref, h_out_ref, c_out_ref, *,
                     H, W, Cin, Ch, Cin_p, Ch_p, K_pad, compute_dtype):
    """One grid step = `batch_block` batch elements.

    x_ref    : (Bblk, Cin, H*W)   input frame, channel-major flat, f32
    h_ref    : (Bblk, Ch,  H*W)   previous hidden state (lane-dense)
    c_ref    : (Bblk, Ch,  H*W)   previous cell state   (lane-dense)
    w_ref    : (4*Ch, K_pad)      transposed im2col weight, bias folded in
    h_out_ref: (Bblk, Ch,  H*W)   f32
    c_out_ref: (Bblk, Ch,  H*W)   f32
    """
    HW = H * W
    C_p = Cin_p + Ch_p
    Bblk = x_ref.shape[0]
    cdt = compute_dtype

    # x-coordinate of every output pixel (lane axis) — used to zero taps whose
    # horizontal shift would wrap across a row boundary in the flat HW layout.
    xcol = lax.broadcasted_iota(jnp.int32, (C_p, HW), 1) % W

    cols = []
    for b in range(Bblk):
        # Channel-major combined image (C_p, HW): [x rows | 0 pad | h rows | 0 pad].
        # Cast to compute_dtype up-front so all downstream relayout traffic is
        # already in the narrow dtype.
        parts = [x_ref[b].astype(cdt)]
        if Cin_p > Cin:
            parts.append(jnp.zeros((Cin_p - Cin, HW), cdt))
        parts.append(h_ref[b].astype(cdt))
        if Ch_p > Ch:
            parts.append(jnp.zeros((Ch_p - Ch, HW), cdt))
        comb = jnp.concatenate(parts, axis=0)                       # (C_p, HW)

        # Vertical (dy) conv padding = zero lanes appended on both ends of the
        # flat HW axis; horizontal (dx) wrap is handled by the xcol masks below.
        zpad = jnp.zeros((C_p, W + 1), cdt)
        padded = jnp.concatenate([zpad, comb, zpad], axis=1)        # (C_p, HW+2W+2)

        taps = []
        for dy in (-1, 0, 1):
            for dx in (-1, 0, 1):
                s = (dy + 1) * W + dx + 1                           # static start
                tap = lax.slice_in_dim(padded, s, s + HW, axis=1)   # (C_p, HW)
                if dx == -1:
                    tap = jnp.where(xcol >= 1, tap, jnp.zeros_like(tap))
                elif dx == 1:
                    tap = jnp.where(xcol <= W - 2, tap, jnp.zeros_like(tap))
                taps.append(tap)
        cols.append(jnp.concatenate(taps, axis=0))                  # (9*C_p, HW)

    N = Bblk * HW
    body = cols[0] if Bblk == 1 else jnp.concatenate(cols, axis=1)  # (9*C_p, N)

    # Bias row (constant 1, matches the bias column of w_ref) + zero K padding.
    extra = [jnp.ones((1, N), cdt)]
    if K_pad > 9 * C_p + 1:
        extra.append(jnp.zeros((K_pad - 9 * C_p - 1, N), cdt))
    im2col = jnp.concatenate([body] + extra, axis=0)                # (K_pad, N)

    # Single MXU pass; result is already gate-major and lane-dense: (4*Ch, N).
    acc = jnp.dot(w_ref[...], im2col, preferred_element_type=jnp.float32)

    for b in range(Bblk):
        a = acc if Bblk == 1 else acc[:, b * HW:(b + 1) * HW]       # (4*Ch, HW)
        gates = jax.nn.sigmoid(a[0:3 * Ch, :])      # i, f, o in one full-width pass
        i_t = gates[0:Ch, :]
        f_t = gates[Ch:2 * Ch, :]
        o_t = gates[2 * Ch:3 * Ch, :]
        g_t = jnp.tanh(a[3 * Ch:4 * Ch, :])

        c_last = c_ref[b].astype(jnp.float32)                        # (Ch, HW)
        c_next = f_t * c_last + i_t * g_t
        h_next = o_t * jnp.tanh(c_next)

        c_out_ref[b] = c_next.astype(c_out_ref.dtype)
        h_out_ref[b] = h_next.astype(h_out_ref.dtype)


def conv_lstm_step(x_flat, h_flat, c_flat, w_full, *, H, W,
                   compute_dtype=jnp.float32, batch_block=1):
    """x/h/c in channel-major flat layout (B, C, H*W); weight from prepare_conv_params."""
    B, Cin, HW = x_flat.shape
    _, Ch, HW2 = h_flat.shape
    assert HW == H * W and HW2 == HW
    assert B % batch_block == 0
    cin_p, ch_p, c_p, k_pad = _layout_dims(Cin, Ch)
    assert w_full.shape == (4 * Ch, k_pad)

    kernel = functools.partial(
        _convlstm_kernel, H=H, W=W, Cin=Cin, Ch=Ch,
        Cin_p=cin_p, Ch_p=ch_p, K_pad=k_pad, compute_dtype=compute_dtype)

    Bb = batch_block
    h_next, c_next = pl.pallas_call(
        kernel,
        out_shape=(
            jax.ShapeDtypeStruct((B, Ch, HW), jnp.float32),   # state kept in f32
            jax.ShapeDtypeStruct((B, Ch, HW), jnp.float32),
        ),
        grid_spec=pltpu.PrefetchScalarGridSpec(
            num_scalar_prefetch=0,
            grid=(B // Bb,),
            in_specs=[
                pl.BlockSpec((Bb, Cin, HW), lambda g: (g, 0, 0)),
                pl.BlockSpec((Bb, Ch, HW), lambda g: (g, 0, 0)),
                pl.BlockSpec((Bb, Ch, HW), lambda g: (g, 0, 0)),
                pl.BlockSpec((4 * Ch, k_pad), lambda g: (0, 0)),
            ],
            out_specs=[
                pl.BlockSpec((Bb, Ch, HW), lambda g: (g, 0, 0)),
                pl.BlockSpec((Bb, Ch, HW), lambda g: (g, 0, 0)),
            ],
        ),
        # Batch grid is independent -> "parallel" so v7x shards it over both TCs
        # (use batch_block=1 there so the grid has >=2 iterations); on single-TC
        # v5e/v6e raise batch_block to amortize the per-step grid overhead.
        compiler_params=pltpu.CompilerParams(
            dimension_semantics=("parallel",),
            vmem_limit_bytes=32 * 1024 * 1024,
        ),
    )(x_flat, h_flat, c_flat, w_full)
    return h_next, c_next


def conv_lstm_cell_nchw(x_nchw, h_last_nchw, c_last_nchw, w_oihw, bias, *,
                        compute_dtype=jnp.float32, batch_block=1):
    """PyTorch-convention entry point (NCHW tensors, OIHW weight).

    All layout conversions are free row-major reshapes.  In a real recurrence
    keep the state as (B, Ch, H*W) and call conv_lstm_step directly, preparing
    the weight once per sequence with prepare_conv_params.
    """
    B, Cin, H, W = x_nchw.shape
    Ch = w_oihw.shape[0] // 4
    if h_last_nchw is None:
        h_last_nchw = jnp.zeros((B, Ch, H, W), jnp.float32)
    if c_last_nchw is None:
        c_last_nchw = jnp.zeros((B, Ch, H, W), jnp.float32)

    w_full = prepare_conv_params(w_oihw, bias, compute_dtype)
    x_flat = x_nchw.reshape(B, Cin, H * W)
    h_flat = h_last_nchw.reshape(B, Ch, H * W)
    c_flat = c_last_nchw.reshape(B, Ch, H * W)

    h_next, c_next = conv_lstm_step(x_flat, h_flat, c_flat, w_full, H=H, W=W,
                                    compute_dtype=compute_dtype,
                                    batch_block=batch_block)
    return h_next.reshape(B, Ch, H, W), c_next.reshape(B, Ch, H, W)


def _reference_nchw(x, h, c, w_oihw, bias):
    """Pure-JAX reference mirroring the PyTorch forward (NCHW)."""
    combined = jnp.concatenate([x, h], axis=1)
    conv = jax.lax.conv_general_dilated(
        combined, w_oihw, window_strides=(1, 1), padding=((1, 1), (1, 1)),
        dimension_numbers=("NCHW", "OIHW", "NCHW"))
    conv = conv + bias[None, :, None, None]
    Ch = c.shape[1]
    cc_i, cc_f, cc_o, cc_g = (conv[:, k * Ch:(k + 1) * Ch] for k in range(4))
    i = jax.nn.sigmoid(cc_i)
    f = jax.nn.sigmoid(cc_f)
    o = jax.nn.sigmoid(cc_o)
    g = jnp.tanh(cc_g)
    c_next = f * c + i * g
    h_next = o * jnp.tanh(c_next)
    return h_next, c_next


if __name__ == "__main__":
    B, Cin, H, W = 2, 4, 16, 16
    Ch = 32

    key = jax.random.PRNGKey(0)
    kx, kh, kc, kw, kb = jax.random.split(key, 5)

    x = jax.random.normal(kx, (B, Cin, H, W), dtype=jnp.float32)
    h_last = jax.random.normal(kh, (B, Ch, H, W), dtype=jnp.float32)
    c_last = jax.random.normal(kc, (B, Ch, H, W), dtype=jnp.float32)

    # Deterministic Conv2d params: weight (4*Ch, Cin+Ch, 3, 3), bias (4*Ch,)
    fan_in = (Cin + Ch) * 3 * 3
    bound = 1.0 / np.sqrt(fan_in)
    w_oihw = jax.random.uniform(kw, (4 * Ch, Cin + Ch, 3, 3),
                                minval=-bound, maxval=bound, dtype=jnp.float32)
    bias = jax.random.uniform(kb, (4 * Ch,), minval=-bound, maxval=bound,
                              dtype=jnp.float32)

    h_ref, c_ref = _reference_nchw(x, h_last, c_last, w_oihw, bias)

    # batch_block=1: one batch element per grid step (>=2 parallel steps, v7x-friendly).
    h1, c1 = conv_lstm_cell_nchw(x, h_last, c_last, w_oihw, bias,
                                 compute_dtype=jnp.float32, batch_block=1)
    jax.block_until_ready((h1, c1))
    np.testing.assert_allclose(np.asarray(h1), np.asarray(h_ref), rtol=1e-4, atol=1e-4)
    np.testing.assert_allclose(np.asarray(c1), np.asarray(c_ref), rtol=1e-4, atol=1e-4)

    # batch_block=2: both batch elements fused into one grid step / one MXU pass
    # (amortizes per-step grid overhead on single-TC v5e/v6e).
    h2, c2 = conv_lstm_cell_nchw(x, h_last, c_last, w_oihw, bias,
                                 compute_dtype=jnp.float32, batch_block=2)
    jax.block_until_ready((h2, c2))
    np.testing.assert_allclose(np.asarray(h2), np.asarray(h_ref), rtol=1e-4, atol=1e-4)
    np.testing.assert_allclose(np.asarray(c2), np.asarray(c_ref), rtol=1e-4, atol=1e-4)

    # NOTE: compute_dtype=jnp.bfloat16 is supported (and recommended on real
    # v5e/v6e/v7x hardware: bf16 MXU operands, f32 accumulate/epilogue) but is
    # intentionally not exercised here because the CPU/interpret dot path does
    # not implement bf16 x bf16 -> f32.

    print("KERNEL_OK")
</pallas_src>

<mosaic_0001>
module attributes {stable_mosaic.version = 11 : i64} {
  func.func @_convlstm_kernel(%arg0: i32, %arg1: memref<1x4x256xf32, #tpu.memory_space<vmem>>, %arg2: memref<1x32x256xf32, #tpu.memory_space<vmem>>, %arg3: memref<1x32x256xf32, #tpu.memory_space<vmem>>, %arg4: memref<128x384xf32, #tpu.memory_space<vmem>>, %arg5: memref<1x32x256xf32, #tpu.memory_space<vmem>>, %arg6: memref<1x32x256xf32, #tpu.memory_space<vmem>>) attributes {dimension_semantics = [#tpu.dimension_semantics<parallel>], iteration_bounds = array<i64: 2>, scalar_prefetch = 0 : i64, scratch_operands = 0 : i64, tpu.core_type = #tpu.core_type<tc>, window_params = [{transform_indices = @transform_0, window_bounds = array<i64: 1, 4, 256>}, {transform_indices = @transform_1, window_bounds = array<i64: 1, 32, 256>}, {transform_indices = @transform_2, window_bounds = array<i64: 1, 32, 256>}, {pipeline_mode = #tpu.pipeline_mode<synchronous>, transform_indices = @transform_3, window_bounds = array<i64: 128, 384>}, {transform_indices = @transform_4, window_bounds = array<i64: 1, 32, 256>}, {transform_indices = @transform_5, window_bounds = array<i64: 1, 32, 256>}]} {
    %0 = tpu.iota {dimensions = array<i32: 1>} : vector<40x256xi32>
    %c16_i32 = arith.constant 16 : i32
    %c0_i32 = arith.constant 0 : i32
    %1 = arith.cmpi eq, %c16_i32, %c0_i32 : i32
    %c1_i32 = arith.constant 1 : i32
    %2 = arith.select %1, %c1_i32, %c16_i32 : i32
    %3 = vector.broadcast %2 : i32 to vector<40x256xi32>
    %4 = arith.remsi %0, %3 : vector<40x256xi32>
    %c0_i32_0 = arith.constant 0 : i32
    %5 = vector.broadcast %c0_i32_0 : i32 to vector<40x256xi32>
    %6 = arith.cmpi ne, %4, %5 : vector<40x256xi32>
    %c0_i32_1 = arith.constant 0 : i32
    %7 = vector.broadcast %c0_i32_1 : i32 to vector<40x256xi32>
    %8 = arith.cmpi slt, %4, %7 : vector<40x256xi32>
    %c0_i32_2 = arith.constant 0 : i32
    %9 = arith.cmpi slt, %2, %c0_i32_2 : i32
    %10 = vector.broadcast %9 : i1 to vector<40x256xi1>
    %11 = vector.broadcast %10 : vector<40x256xi1> to vector<40x256xi1>
    %12 = arith.xori %8, %11 : vector<40x256xi1>
    %13 = arith.andi %12, %6 : vector<40x256xi1>
    %14 = vector.broadcast %2 : i32 to vector<40x256xi32>
    %15 = arith.addi %4, %14 : vector<40x256xi32>
    %16 = arith.select %13, %15, %4 : vector<40x256xi1>, vector<40x256xi32>
    %c0 = arith.constant 0 : index
    %c0_3 = arith.constant 0 : index
    %c0_4 = arith.constant 0 : index
    %17 = vector.load %arg1[%c0, %c0_3, %c0_4] : memref<1x4x256xf32, #tpu.memory_space<vmem>>, vector<1x4x256xf32>
    %18 = vector.shape_cast %17 : vector<1x4x256xf32> to vector<4x256xf32>
    %cst = arith.constant 0.000000e+00 : f32
    %19 = vector.broadcast %cst : f32 to vector<4x256xf32>
    %c0_5 = arith.constant 0 : index
    %c0_6 = arith.constant 0 : index
    %c0_7 = arith.constant 0 : index
    %20 = vector.load %arg2[%c0_5, %c0_6, %c0_7] : memref<1x32x256xf32, #tpu.memory_space<vmem>>, vector<1x32x256xf32>
    %21 = vector.shape_cast %20 : vector<1x32x256xf32> to vector<32x256xf32>
    %22 = tpu.concatenate %18, %19, %21 in 0 : vector<4x256xf32>, vector<4x256xf32>, vector<32x256xf32> -> vector<40x256xf32>
    %cst_8 = arith.constant 0.000000e+00 : f32
    %23 = vector.broadcast %cst_8 : f32 to vector<40x17xf32>
    %24 = tpu.concatenate %23, %22, %23 in 1 : vector<40x17xf32>, vector<40x256xf32>, vector<40x17xf32> -> vector<40x290xf32>
    %25 = vector.extract_strided_slice %24 {offsets = [0, 0], sizes = [40, 256], strides = [1, 1]} : vector<40x290xf32> to vector<40x256xf32>
    %c1_i32_9 = arith.constant 1 : i32
    %26 = vector.broadcast %c1_i32_9 : i32 to vector<40x256xi32>
    %27 = arith.cmpi sge, %16, %26 : vector<40x256xi32>
    %cst_10 = arith.constant 0.000000e+00 : f32
    %28 = vector.broadcast %cst_10 : f32 to vector<40x256xf32>
    %29 = arith.select %27, %25, %28 : vector<40x256xi1>, vector<40x256xf32>
    %30 = vector.extract_strided_slice %24 {offsets = [0, 1], sizes = [40, 256], strides = [1, 1]} : vector<40x290xf32> to vector<40x256xf32>
    %31 = vector.extract_strided_slice %24 {offsets = [0, 2], sizes = [40, 256], strides = [1, 1]} : vector<40x290xf32> to vector<40x256xf32>
    %c14_i32 = arith.constant 14 : i32
    %32 = vector.broadcast %c14_i32 : i32 to vector<40x256xi32>
    %33 = arith.cmpi sle, %16, %32 : vector<40x256xi32>
    %cst_11 = arith.constant 0.000000e+00 : f32
    %34 = vector.broadcast %cst_11 : f32 to vector<40x256xf32>
    %35 = arith.select %33, %31, %34 : vector<40x256xi1>, vector<40x256xf32>
    %36 = vector.extract_strided_slice %24 {offsets = [0, 16], sizes = [40, 256], strides = [1, 1]} : vector<40x290xf32> to vector<40x256xf32>
    %c1_i32_12 = arith.constant 1 : i32
    %37 = vector.broadcast %c1_i32_12 : i32 to vector<40x256xi32>
    %38 = arith.cmpi sge, %16, %37 : vector<40x256xi32>
    %cst_13 = arith.constant 0.000000e+00 : f32
    %39 = vector.broadcast %cst_13 : f32 to vector<40x256xf32>
    %40 = arith.select %38, %36, %39 : vector<40x256xi1>, vector<40x256xf32>
    %41 = vector.extract_strided_slice %24 {offsets = [0, 17], sizes = [40, 256], strides = [1, 1]} : vector<40x290xf32> to vector<40x256xf32>
    %42 = vector.extract_strided_slice %24 {offsets = [0, 18], sizes = [40, 256], strides = [1, 1]} : vector<40x290xf32> to vector<40x256xf32>
    %c14_i32_14 = arith.constant 14 : i32
    %43 = vector.broadcast %c14_i32_14 : i32 to vector<40x256xi32>
    %44 = arith.cmpi sle, %16, %43 : vector<40x256xi32>
    %cst_15 = arith.constant 0.000000e+00 : f32
    %45 = vector.broadcast %cst_15 : f32 to vector<40x256xf32>
    %46 = arith.select %44, %42, %45 : vector<40x256xi1>, vector<40x256xf32>
    %47 = vector.extract_strided_slice %24 {offsets = [0, 32], sizes = [40, 256], strides = [1, 1]} : vector<40x290xf32> to vector<40x256xf32>
    %c1_i32_16 = arith.constant 1 : i32
    %48 = vector.broadcast %c1_i32_16 : i32 to vector<40x256xi32>
    %49 = arith.cmpi sge, %16, %48 : vector<40x256xi32>
    %cst_17 = arith.constant 0.000000e+00 : f32
    %50 = vector.broadcast %cst_17 : f32 to vector<40x256xf32>
    %51 = arith.select %49, %47, %50 : vector<40x256xi1>, vector<40x256xf32>
    %52 = vector.extract_strided_slice %24 {offsets = [0, 33], sizes = [40, 256], strides = [1, 1]} : vector<40x290xf32> to vector<40x256xf32>
    %53 = vector.extract_strided_slice %24 {offsets = [0, 34], sizes = [40, 256], strides = [1, 1]} : vector<40x290xf32> to vector<40x256xf32>
    %c14_i32_18 = arith.constant 14 : i32
    %54 = vector.broadcast %c14_i32_18 : i32 to vector<40x256xi32>
    %55 = arith.cmpi sle, %16, %54 : vector<40x256xi32>
    %cst_19 = arith.constant 0.000000e+00 : f32
    %56 = vector.broadcast %cst_19 : f32 to vector<40x256xf32>
    %57 = arith.select %55, %53, %56 : vector<40x256xi1>, vector<40x256xf32>
    %58 = tpu.concatenate %29, %30, %35, %40, %41, %46, %51, %52, %57 in 0 : vector<40x256xf32>, vector<40x256xf32>, vector<40x256xf32>, vector<40x256xf32>, vector<40x256xf32>, vector<40x256xf32>, vector<40x256xf32>, vector<40x256xf32>, vector<40x256xf32> -> vector<360x256xf32>
    %cst_20 = arith.constant 1.000000e+00 : f32
    %59 = vector.broadcast %cst_20 : f32 to vector<1x256xf32>
    %cst_21 = arith.constant 0.000000e+00 : f32
    %60 = vector.broadcast %cst_21 : f32 to vector<23x256xf32>
    %61 = tpu.concatenate %58, %59, %60 in 0 : vector<360x256xf32>, vector<1x256xf32>, vector<23x256xf32> -> vector<384x256xf32>
    %c0_22 = arith.constant 0 : index
    %c0_23 = arith.constant 0 : index
    %62 = vector.load %arg4[%c0_22, %c0_23] : memref<128x384xf32, #tpu.memory_space<vmem>>, vector<128x384xf32>
    %cst_24 = arith.constant dense<0.000000e+00> : vector<128x256xf32>
    %63 = tpu.matmul %62, %61, %cst_24 {dimension_numbers = #tpu.dot_dimension_numbers<[1], [0], [0], [1], [0, 0, 1, 1], [], []>} : vector<128x384xf32>, vector<384x256xf32>, vector<128x256xf32> -> vector<128x256xf32>
    %64 = vector.extract_strided_slice %63 {offsets = [0, 0], sizes = [96, 256], strides = [1, 1]} : vector<128x256xf32> to vector<96x256xf32>
    %65 = arith.negf %64 : vector<96x256xf32>
    %66 = math.exp %65 : vector<96x256xf32>
    %cst_25 = arith.constant 1.000000e+00 : f32
    %67 = vector.broadcast %cst_25 : f32 to vector<96x256xf32>
    %68 = arith.addf %67, %66 : vector<96x256xf32>
    %69 = arith.divf %67, %68 : vector<96x256xf32>
    %70 = vector.extract_strided_slice %69 {offsets = [0, 0], sizes = [32, 256], strides = [1, 1]} : vector<96x256xf32> to vector<32x256xf32>
    %71 = vector.extract_strided_slice %69 {offsets = [32, 0], sizes = [32, 256], strides = [1, 1]} : vector<96x256xf32> to vector<32x256xf32>
    %72 = vector.extract_strided_slice %69 {offsets = [64, 0], sizes = [32, 256], strides = [1, 1]} : vector<96x256xf32> to vector<32x256xf32>
    %73 = vector.extract_strided_slice %63 {offsets = [96, 0], sizes = [32, 256], strides = [1, 1]} : vector<128x256xf32> to vector<32x256xf32>
    %74 = math.tanh %73 : vector<32x256xf32>
    %c0_26 = arith.constant 0 : index
    %c0_27 = arith.constant 0 : index
    %c0_28 = arith.constant 0 : index
    %75 = vector.load %arg3[%c0_26, %c0_27, %c0_28] : memref<1x32x256xf32, #tpu.memory_space<vmem>>, vector<1x32x256xf32>
    %76 = vector.shape_cast %75 : vector<1x32x256xf32> to vector<32x256xf32>
    %77 = arith.mulf %71, %76 : vector<32x256xf32>
    %78 = arith.mulf %70, %74 : vector<32x256xf32>
    %79 = arith.addf %77, %78 : vector<32x256xf32>
    %80 = math.tanh %79 : vector<32x256xf32>
    %81 = arith.mulf %72, %80 : vector<32x256xf32>
    %c0_29 = arith.constant 0 : index
    %c0_30 = arith.constant 0 : index
    %c0_31 = arith.constant 0 : index
    %82 = vector.load %arg6[%c0_29, %c0_30, %c0_31] : memref<1x32x256xf32, #tpu.memory_space<vmem>>, vector<1x32x256xf32>
    %83 = vector.shape_cast %82 : vector<1x32x256xf32> to vector<32x256xf32>
    %84 = vector.shape_cast %79 : vector<32x256xf32> to vector<1x32x256xf32>
    tpu.vector_store %arg6[%c0_29, %c0_30, %c0_31], %84 {strides = array<i32>} : memref<1x32x256xf32, #tpu.memory_space<vmem>>, vector<1x32x256xf32>,
    %c0_32 = arith.constant 0 : index
    %c0_33 = arith.constant 0 : index
    %c0_34 = arith.constant 0 : index
    %85 = vector.load %arg5[%c0_32, %c0_33, %c0_34] : memref<1x32x256xf32, #tpu.memory_space<vmem>>, vector<1x32x256xf32>
    %86 = vector.shape_cast %85 : vector<1x32x256xf32> to vector<32x256xf32>
    %87 = vector.shape_cast %81 : vector<32x256xf32> to vector<1x32x256xf32>
    tpu.vector_store %arg5[%c0_32, %c0_33, %c0_34], %87 {strides = array<i32>} : memref<1x32x256xf32, #tpu.memory_space<vmem>>, vector<1x32x256xf32>,
    return
  }
  func.func @transform_0(%arg0: i32) -> (i32, i32, i32) {
    %c0_i32 = arith.constant 0 : i32
    %c0_i32_0 = arith.constant 0 : i32
    %c0_i32_1 = arith.constant 0 : i32
    return %arg0, %c0_i32, %c0_i32_0 : i32, i32, i32
  }
  func.func @transform_1(%arg0: i32) -> (i32, i32, i32) {
    %c0_i32 = arith.constant 0 : i32
    %c0_i32_0 = arith.constant 0 : i32
    %c0_i32_1 = arith.constant 0 : i32
    return %arg0, %c0_i32, %c0_i32_0 : i32, i32, i32
  }
  func.func @transform_2(%arg0: i32) -> (i32, i32, i32) {
    %c0_i32 = arith.constant 0 : i32
    %c0_i32_0 = arith.constant 0 : i32
    %c0_i32_1 = arith.constant 0 : i32
    return %arg0, %c0_i32, %c0_i32_0 : i32, i32, i32
  }
  func.func @transform_3(%arg0: i32) -> (i32, i32) {
    %c0_i32 = arith.constant 0 : i32
    %c0_i32_0 = arith.constant 0 : i32
    %c0_i32_1 = arith.constant 0 : i32
    return %c0_i32, %c0_i32_0 : i32, i32
  }
  func.func @transform_4(%arg0: i32) -> (i32, i32, i32) {
    %c0_i32 = arith.constant 0 : i32
    %c0_i32_0 = arith.constant 0 : i32
    %c0_i32_1 = arith.constant 0 : i32
    return %arg0, %c0_i32, %c0_i32_0 : i32, i32, i32
  }
  func.func @transform_5(%arg0: i32) -> (i32, i32, i32) {
    %c0_i32 = arith.constant 0 : i32
    %c0_i32_0 = arith.constant 0 : i32
    %c0_i32_1 = arith.constant 0 : i32
    return %arg0, %c0_i32, %c0_i32_0 : i32, i32, i32
  }
}

</mosaic_0001>

<llo_original>
// kernel: tpu_custom_call.1
$region0: #{tpu_custom_call.1}
  #allocation0 [shape = 'u32[]', space=smem, size = 0x4, offset = 0x4, fixed_abs, tag = 'smem constant byte address 0x4 - core index']
  #allocation1 [shape = 'u32[144,128]{1,0:T(1,128)}', space=vmem, size = 0x12000, scoped, tag = 'internal scratch']
  %s0 = inlined_call_operand.hbm [shape: f32[2,4,256], index: 0, kind: input, shape index: {}]
  %s1 = inlined_call_operand.hbm [shape: f32[2,32,256], index: 1, kind: input, shape index: {}]
  %s2 = inlined_call_operand.hbm [shape: f32[2,32,256], index: 2, kind: input, shape index: {}]
  %s3 = inlined_call_operand.hbm [shape: f32[128,384], index: 3, kind: input, shape index: {}]
  %s4 = inlined_call_operand.hbm [shape: f32[2,32,256], index: 4, kind: output, shape index: {0}]
  %s5 = inlined_call_operand.hbm [shape: f32[2,32,256], index: 5, kind: output, shape index: {1}]
  %6 = xla_tuple %s4, %s5
  %s7 = sld [smem:[#allocation0]]
  $region73: #{tpu_custom_call.1} parent=0
    _
  %s9 = ssub.s32 1, %s7
  %s10 = scalar_select 0, %s9, %s7
  $region1: #{tpu_custom_call.1} parent=0
    #allocation2 [shape = 'u8[8192]{0}', space=vmem, size = 0x2000, scoped, tag = 'input window, operand 0']
    #allocation3 [shape = 's32[2]{0}', space=sflag, size = 0x8, scoped, tag = 'scoped memory for tpu_custom_call.1']
    #allocation4 [shape = 's32[2]{0}', space=sflag, size = 0x8, scoped, tag = 'scoped memory for tpu_custom_call.1']
    #allocation5 [shape = 'u8[65536]{0}', space=vmem, size = 0x10000, scoped, tag = 'input window, operand 1']
    #allocation6 [shape = 's32[2]{0}', space=sflag, size = 0x8, scoped, tag = 'scoped memory for tpu_custom_call.1']
    #allocation7 [shape = 'u8[65536]{0}', space=vmem, size = 0x10000, scoped, tag = 'input window, operand 2']
    #allocation8 [shape = 'u8[196608]{0}', space=vmem, size = 0x30000, scoped, tag = 'input window, operand 3, single buffered']
    #allocation9 [shape = 's32[1]{0}', space=sflag, size = 0x4, scoped, tag = 'scoped memory for tpu_custom_call.1']
    #allocation10 [shape = 'u8[65536]{0}', space=vmem, size = 0x10000, scoped, tag = 'output window, operand 0']
    #allocation11 [shape = 'u8[65536]{0}', space=vmem, size = 0x10000, scoped, tag = 'output window, operand 1']
    #allocation12 [shape = 's32[2]{0}', space=sflag, size = 0x8, scoped, tag = 'scoped memory for tpu_custom_call.1']
    %11 = vsyncpa [#allocation3], 0
    %s12 = scalar_lea.sflag [#allocation3], 1
    %13 = vsyncpa %s12, 0
    %14 = vsyncpa [#allocation6], 0
    %s15 = scalar_lea.sflag [#allocation6], 1
    %16 = vsyncpa %s15, 0
    %17 = vsyncpa [#allocation9], 0
    %18 = vsyncpa [#allocation4], 0
    %s19 = scalar_lea.sflag [#allocation4], 1
    %20 = vsyncpa %s19, 0
    %21 = vsyncpa [#allocation12], 0
    %s22 = scalar_lea.sflag [#allocation12], 1
    %23 = vsyncpa %s22, 0
    loop: start=0, step=1, limit=4
    $region2: #{tpu_custom_call.1} parent=1 // loop_pre_header
      _
    $region3: #{tpu_custom_call.1} parent=1 // loop_header
      %s25 = sphi 0, %s29
      %p26 = scmp.ge.s32.totalorder %s25, 4
      %s35 = sphi 0, %s37
      %s38 = sphi 0, %s35
      %s39 = sphi 0, %s38
      %s55 = sphi 0, %s39
      %s61 = sphi 0, %s63
      %s64 = sphi 0, %s61
      %s65 = sphi 0, %s64
      %s81 = sphi 0, %s65
      %s87 = sphi 0, %s89
      %s90 = sphi 0, %s87
      %s91 = sphi 0, %s90
      %s107 = sphi 0, %s91
      %s111 = sphi 0, %s111
      %s113 = sphi 0, %s111
      %s114 = sphi 0, %s113
      %s128 = sphi 0, %s114
      %s134 = sphi 0, %s136
      %s137 = sphi 0, %s134
      %s138 = sphi 0, %s137
      %s154 = sphi 0, %s138
      %s160 = sphi 0, %s162
      %s163 = sphi 0, %s160
      %s164 = sphi 0, %s163
      %s180 = sphi 0, %s164
    $region4: #{tpu_custom_call.1} parent=1 // loop_header_branch
      %28 = sbr.rel (%p26) target = $region8
    $region5: #{tpu_custom_call.1} parent=1 // loop_body
      %s30 = ssub.s32 %s25, 1
      %s31 = ssub.s32 %s25, 2
      %s32 = sadd.s32 %s25, 1
      %s33 = ssub.s32 %s25, %s32
      %p34 = scmp.eq.s32.totalorder %s33, 0
      %s36 = sadd.s32 %s35, 1
      %s37 = scalar_select %p34, %s35, %s36
      %p40 = pneg %p34
      %p41 = scmp.eq.s32.totalorder %s25, 1
      %p42 = por %p40, %p41
      %p43 = scmp.ne.s32.totalorder %s35, %s38
      %p44 = scmp.eq.s32.totalorder %s25, 0
      %p45 = por %p43, %p44
      %p46 = scmp.ne.s32.totalorder %s35, %s38
      %p47 = scmp.eq.s32.totalorder %s30, 1
      %p48 = por %p46, %p47
      %p49 = scmp.ne.s32.totalorder %s38, %s39
      %p50 = scmp.eq.s32.totalorder %s30, 0
      %p51 = por %p49, %p50
      %p52 = scmp.ne.s32.totalorder %s38, %s39
      %p53 = scmp.eq.s32.totalorder %s31, 1
      %p54 = por %p52, %p53
      %p56 = scmp.ne.s32.totalorder %s39, %s55
      %p57 = scmp.eq.s32.totalorder %s31, 0
      %p58 = por %p56, %p57
      %s59 = ssub.s32 %s25, %s32
      %p60 = scmp.eq.s32.totalorder %s59, 0
      %s62 = sadd.s32 %s61, 1
      %s63 = scalar_select %p60, %s61, %s62
      %p66 = pneg %p60
      %p67 = scmp.eq.s32.totalorder %s25, 1
      %p68 = por %p66, %p67
      %p69 = scmp.ne.s32.totalorder %s61, %s64
      %p70 = scmp.eq.s32.totalorder %s25, 0
      %p71 = por %p69, %p70
      %p72 = scmp.ne.s32.totalorder %s61, %s64
      %p73 = scmp.eq.s32.totalorder %s30, 1
      %p74 = por %p72, %p73
      %p75 = scmp.ne.s32.totalorder %s64, %s65
      %p76 = scmp.eq.s32.totalorder %s30, 0
      %p77 = por %p75, %p76
      %p78 = scmp.ne.s32.totalorder %s64, %s65
      %p79 = scmp.eq.s32.totalorder %s31, 1
      %p80 = por %p78, %p79
      %p82 = scmp.ne.s32.totalorder %s65, %s81
      %p83 = scmp.eq.s32.totalorder %s31, 0
      %p84 = por %p82, %p83
      %s85 = ssub.s32 %s25, %s32
      %p86 = scmp.eq.s32.totalorder %s85, 0
      %s88 = sadd.s32 %s87, 1
      %s89 = scalar_select %p86, %s87, %s88
      %p92 = pneg %p86
      %p93 = scmp.eq.s32.totalorder %s25, 1
      %p94 = por %p92, %p93
      %p95 = scmp.ne.s32.totalorder %s87, %s90
      %p96 = scmp.eq.s32.totalorder %s25, 0
      %p97 = por %p95, %p96
      %p98 = scmp.ne.s32.totalorder %s87, %s90
      %p99 = scmp.eq.s32.totalorder %s30, 1
      %p100 = por %p98, %p99
      %p101 = scmp.ne.s32.totalorder %s90, %s91
      %p102 = scmp.eq.s32.totalorder %s30, 0
      %p103 = por %p101, %p102
      %p104 = scmp.ne.s32.totalorder %s90, %s91
      %p105 = scmp.eq.s32.totalorder %s31, 1
      %p106 = por %p104, %p105
      %p108 = scmp.ne.s32.totalorder %s91, %s107
      %p109 = scmp.eq.s32.totalorder %s31, 0
      %p110 = por %p108, %p109
      %s112 = sadd.s32 %s111, 1
      %p115 = scmp.eq.s32.totalorder %s25, 1
      %p116 = scmp.ne.s32.totalorder %s111, %s113
      %p117 = scmp.eq.s32.totalorder %s25, 0
      %p118 = por %p116, %p117
      %p119 = scmp.ne.s32.totalorder %s111, %s113
      %p120 = scmp.eq.s32.totalorder %s30, 1
      %p121 = por %p119, %p120
      %p122 = scmp.ne.s32.totalorder %s113, %s114
      %p123 = scmp.eq.s32.totalorder %s30, 0
      %p124 = por %p122, %p123
      %p125 = scmp.ne.s32.totalorder %s113, %s114
      %p126 = scmp.eq.s32.totalorder %s31, 1
      %p127 = por %p125, %p126
      %p129 = scmp.ne.s32.totalorder %s114, %s128
      %p130 = scmp.eq.s32.totalorder %s31, 0
      %p131 = por %p129, %p130
      %s132 = ssub.s32 %s25, %s32
      %p133 = scmp.eq.s32.totalorder %s132, 0
      %s135 = sadd.s32 %s134, 1
      %s136 = scalar_select %p133, %s134, %s135
      %p139 = pneg %p133
      %p140 = scmp.eq.s32.totalorder %s25, 1
      %p141 = por %p139, %p140
      %p142 = scmp.ne.s32.totalorder %s134, %s137
      %p143 = scmp.eq.s32.totalorder %s25, 0
      %p144 = por %p142, %p143
      %p145 = scmp.ne.s32.totalorder %s134, %s137
      %p146 = scmp.eq.s32.totalorder %s30, 1
      %p147 = por %p145, %p146
      %p148 = scmp.ne.s32.totalorder %s137, %s138
      %p149 = scmp.eq.s32.totalorder %s30, 0
      %p150 = por %p148, %p149
      %p151 = scmp.ne.s32.totalorder %s137, %s138
      %p152 = scmp.eq.s32.totalorder %s31, 1
      %p153 = por %p151, %p152
      %p155 = scmp.ne.s32.totalorder %s138, %s154
      %p156 = scmp.eq.s32.totalorder %s31, 0
      %p157 = por %p155, %p156
      %s158 = ssub.s32 %s25, %s32
      %p159 = scmp.eq.s32.totalorder %s158, 0
      %s161 = sadd.s32 %s160, 1
      %s162 = scalar_select %p159, %s160, %s161
      %p165 = pneg %p159
      %p166 = scmp.eq.s32.totalorder %s25, 1
      %p167 = por %p165, %p166
      %p168 = scmp.ne.s32.totalorder %s160, %s163
      %p169 = scmp.eq.s32.totalorder %s25, 0
      %p170 = por %p168, %p169
      %p171 = scmp.ne.s32.totalorder %s160, %s163
      %p172 = scmp.eq.s32.totalorder %s30, 1
      %p173 = por %p171, %p172
      %p174 = scmp.ne.s32.totalorder %s163, %s164
      %p175 = scmp.eq.s32.totalorder %s30, 0
      %p176 = por %p174, %p175
      %p177 = scmp.ne.s32.totalorder %s163, %s164
      %p178 = scmp.eq.s32.totalorder %s31, 1
      %p179 = por %p177, %p178
      %p181 = scmp.ne.s32.totalorder %s164, %s180
      %p182 = scmp.eq.s32.totalorder %s31, 0
      %p183 = por %p181, %p182
      %p184 = scmp.le.s32.totalorder 1, %s25
      %p185 = scmp.lt.s32.totalorder %s25, 3
      %p186 = pnand %p184, %p185
      %p187 = pneg %p186
      // Predicated region
      $region9: #{tpu_custom_call.1} parent=5 // pred_check
        _
      $region10: #{tpu_custom_call.1} parent=5 // pred_check_branch
        %189 = sbr.rel (%p186) target = $region12
      $region11: #{tpu_custom_call.1} parent=5 // pred_region
        %s190 = ssub.s32 %s25, 1
        // Predicated region
        $region13: #{tpu_custom_call.1} parent=11 // pred_check
          %p191 = pneg %p124
        $region14: #{tpu_custom_call.1} parent=11 // pred_check_branch
          %193 = sbr.rel (%p191) target = $region16
        $region15: #{tpu_custom_call.1} parent=11 // pred_region
          %s195 = ssub.s32 6144, 6144
          %196 = vsyncadd [#allocation9], %s195
          %s197 = sshll.u32 [#allocation8], 4
          %s198 = int_to_ptr.vmem [resolvable:$true] %s197
          %203 = dma.hbm_to_vmem [thread:$0]  %s3, 6144, %s198, [#allocation9], 384, 384, 24
        $region16: #{tpu_custom_call.1} parent=11 // pred_fallthru
          _
      $region12: #{tpu_custom_call.1} parent=5 // pred_fallthru
        _
      %p204 = scmp.lt.s32.totalorder %s25, 2
      // Predicated region
      $region17: #{tpu_custom_call.1} parent=5 // pred_check
        %p205 = pneg %p204
      $region18: #{tpu_custom_call.1} parent=5 // pred_check_branch
        %207 = sbr.rel (%p205) target = $region20
      $region19: #{tpu_custom_call.1} parent=5 // pred_region
        // Predicated region
        $region21: #{tpu_custom_call.1} parent=19 // pred_check
          %p208 = pneg %p45
        $region22: #{tpu_custom_call.1} parent=19 // pred_check_branch
          %210 = sbr.rel (%p208) target = $region24
        $region23: #{tpu_custom_call.1} parent=19 // pred_region
          %s211 = sand.u32 %s35, 1
          %s212 = scalar_lea.sflag [#allocation3], %s211
          %s213 = sand.u32 %s35, 1
          %s214 = smul.addr %s213, 8
          %s215 = scalar_lea.vmem [#allocation2], %s214
          %s217 = ssub.s32 128, 128
          %218 = vsyncadd %s212, %s217
          %s219 = smul.addr %s25, 2
          %s220 = smul.addr %s219, 64
          %s221 = scalar_lea.hbm %s0, %s220
          %s223 = sshll.u32 %s215, 4
          %s224 = int_to_ptr.vmem [resolvable:$true] %s223
          %226 = dma.hbm_to_vmem [thread:$0]  %s221, 128, %s224, %s212
        $region24: #{tpu_custom_call.1} parent=19 // pred_fallthru
          _
        // Predicated region
        $region25: #{tpu_custom_call.1} parent=19 // pred_check
          %p227 = pneg %p71
        $region26: #{tpu_custom_call.1} parent=19 // pred_check_branch
          %229 = sbr.rel (%p227) target = $region28
        $region27: #{tpu_custom_call.1} parent=19 // pred_region
          %s230 = sand.u32 %s25, 1
          %s231 = scalar_lea.sflag [#allocation6], %s230
          %s232 = sand.u32 %s61, 1
          %s233 = smul.addr %s232, 64
          %s234 = scalar_lea.vmem [#allocation5], %s233
          %s236 = ssub.s32 1024, 1024
          %237 = vsyncadd %s231, %s236
          %s238 = smul.addr %s25, 8
          %s239 = smul.addr %s238, 128
          %s240 = scalar_lea.hbm %s1, %s239
          %s241 = sshll.u32 %s234, 4
          %s242 = int_to_ptr.vmem [resolvable:$true] %s241
          %247 = dma.hbm_to_vmem [thread:$0]  %s240, 1024, %s242, %s231, 256, 256, 16
        $region28: #{tpu_custom_call.1} parent=19 // pred_fallthru
          _
        // Predicated region
        $region29: #{tpu_custom_call.1} parent=19 // pred_check
          %p248 = pneg %p97
        $region30: #{tpu_custom_call.1} parent=19 // pred_check_branch
          %250 = sbr.rel (%p248) target = $region32
        $region31: #{tpu_custom_call.1} parent=19 // pred_region
          %s251 = sand.u32 %s25, 1
          %s252 = scalar_lea.sflag [#allocation6], %s251
          %s253 = sand.u32 %s87, 1
          %s254 = smul.addr %s253, 64
          %s255 = scalar_lea.vmem [#allocation7], %s254
          %s257 = ssub.s32 1024, 1024
          %258 = vsyncadd %s252, %s257
          %s259 = smul.addr %s25, 8
          %s260 = smul.addr %s259, 128
          %s261 = scalar_lea.hbm %s2, %s260
          %s262 = sshll.u32 %s255, 4
          %s263 = int_to_ptr.vmem [resolvable:$true] %s262
          %268 = dma.hbm_to_vmem [thread:$0]  %s261, 1024, %s263, %s252, 256, 256, 16
        $region32: #{tpu_custom_call.1} parent=19 // pred_fallthru
          _
      $region20: #{tpu_custom_call.1} parent=5 // pred_fallthru
        _
      %p269 = scmp.le.s32.totalorder 1, %s25
      %p270 = scmp.lt.s32.totalorder %s25, 3
      %p271 = pnand %p269, %p270
      %p272 = pneg %p271
      // Predicated region
      $region33: #{tpu_custom_call.1} parent=5 // pred_check
        _
      $region34: #{tpu_custom_call.1} parent=5 // pred_check_branch
        %274 = sbr.rel (%p271) target = $region36
      $region35: #{tpu_custom_call.1} parent=5 // pred_region
        %s275 = ssub.s32 %s25, 1
        %s276 = sand.u32 %s38, 1
        %s277 = scalar_lea.sflag [#allocation3], %s276
        %s278 = sand.u32 %s38, 1
        %s279 = smul.addr %s278, 8
        %s280 = scalar_lea.vmem [#allocation2], %s279
        // Predicated region
        $region37: #{tpu_custom_call.1} parent=35 // pred_check
          %p281 = pneg %p51
        $region38: #{tpu_custom_call.1} parent=35 // pred_check_branch
          %283 = sbr.rel (%p281) target = $region40
        $region39: #{tpu_custom_call.1} parent=35 // pred_region
          %284 = dma.done %s277, 128
        $region40: #{tpu_custom_call.1} parent=35 // pred_fallthru
          _
        %s285 = sand.u32 %s30, 1
        %s286 = scalar_lea.sflag [#allocation6], %s285
        %s287 = sand.u32 %s64, 1
        %s288 = smul.addr %s287, 64
        %s289 = scalar_lea.vmem [#allocation5], %s288
        // Predicated region
        $region41: #{tpu_custom_call.1} parent=35 // pred_check
          %p290 = pneg %p77
        $region42: #{tpu_custom_call.1} parent=35 // pred_check_branch
          %292 = sbr.rel (%p290) target = $region44
        $region43: #{tpu_custom_call.1} parent=35 // pred_region
          %293 = dma.done %s286, 1024
        $region44: #{tpu_custom_call.1} parent=35 // pred_fallthru
          _
        %s294 = sand.u32 %s30, 1
        %s295 = scalar_lea.sflag [#allocation6], %s294
        %s296 = sand.u32 %s90, 1
        %s297 = smul.addr %s296, 64
        %s298 = scalar_lea.vmem [#allocation7], %s297
        // Predicated region
        $region45: #{tpu_custom_call.1} parent=35 // pred_check
          %p299 = pneg %p103
        $region46: #{tpu_custom_call.1} parent=35 // pred_check_branch
          %301 = sbr.rel (%p299) target = $region48
        $region47: #{tpu_custom_call.1} parent=35 // pred_region
          %302 = dma.done %s295, 1024
        $region48: #{tpu_custom_call.1} parent=35 // pred_fallthru
          _
        // Predicated region
        $region49: #{tpu_custom_call.1} parent=35 // pred_check
          %p303 = pneg %p124
        $region50: #{tpu_custom_call.1} parent=35 // pred_check_branch
          %305 = sbr.rel (%p303) target = $region52
        $region51: #{tpu_custom_call.1} parent=35 // pred_region
          %306 = dma.done [#allocation9], 6144
        $region52: #{tpu_custom_call.1} parent=35 // pred_fallthru
          _
        %s307 = sand.u32 %s38, 1
        %s308 = scalar_lea.sflag [#allocation3], %s307
        %s309 = sand.u32 %s38, 1
        %s310 = smul.addr %s309, 8
        %s311 = scalar_lea.vmem [#allocation2], %s310
        %p312 = pneg %p51
        %p313 = pneg %p48
        %s314 = sand.u32 %s30, 1
        %s315 = scalar_lea.sflag [#allocation6], %s314
        %s316 = sand.u32 %s64, 1
        %s317 = smul.addr %s316, 64
        %s318 = scalar_lea.vmem [#allocation5], %s317
        %p319 = pneg %p77
        %p320 = pneg %p74
        %s321 = sand.u32 %s30, 1
        %s322 = scalar_lea.sflag [#allocation6], %s321
        %s323 = sand.u32 %s90, 1
        %s324 = smul.addr %s323, 64
        %s325 = scalar_lea.vmem [#allocation7], %s324
        %p326 = pneg %p103
        %p327 = pneg %p100
        %p328 = pneg %p124
        %p329 = pneg %p121
        %p330 = pneg %p150
        %p331 = pneg %p147
        %s332 = sand.u32 %s137, 1
        %s333 = scalar_lea.sflag [#allocation4], %s332
        %s334 = sand.u32 %s137, 1
        %s335 = smul.addr %s334, 64
        %s336 = scalar_lea.vmem [#allocation10], %s335
        %p337 = pneg %p176
        %p338 = pneg %p173
        %s339 = sand.u32 %s163, 1
        %s340 = scalar_lea.sflag [#allocation12], %s339
        %s341 = sand.u32 %s163, 1
        %s342 = smul.addr %s341, 64
        %s343 = scalar_lea.vmem [#allocation11], %s342
        %v344 = vlaneseq
        %v345 = vand.u32 %v344, 127
        %v346 = vadd.s32 %v345, 128
        %vm347 = vcmp.lt.s32.totalorder %v345, 0
        %v348 = vsub.s32 0, %v345
        %v349 = vsel %vm347, %v348, %v345
        %v350 = vshrl.u32 %v349, 4
        %v351 = vand.u32 %v349, 15
        %v352 = vsub.s32 0, %v351
        %v353 = vsel %vm347, %v352, %v351
        %vm354 = vcmp.lt.s32.totalorder %v346, 0
        %v355 = vsub.s32 0, %v346
        %v356 = vsel %vm354, %v355, %v346
        %v357 = vshrl.u32 %v356, 4
        %v358 = vand.u32 %v356, 15
        %v359 = vsub.s32 0, %v358
        %v360 = vsel %vm354, %v359, %v358
        %vm361 = vcmp.ne.s32.totalorder %v353, 0
        %vm362 = vcmp.ne.s32.totalorder %v360, 0
        %vm363 = vcmp.lt.s32.totalorder %v353, 0
        %vm364 = vcmp.lt.s32.totalorder %v360, 0
        %vm365 = vmand %vm363, %vm361
        %vm366 = vmand %vm364, %vm362
        %v367 = vadd.s32 %v353, 16
        %v368 = vadd.s32 %v360, 16
        %v369 = vsel %vm365, %v367, %v353
        %v370 = vsel %vm366, %v368, %v360
        %v371 = vld [vmem:[%s280] sm:$0xff]
        %v372 = vld [vmem:[%s289] sm:$0xff]
        %v373 = vld [vmem:[%s289 + $0x8] sm:$0xff]
        %v374 = vld [vmem:[%s289 + $0x10] sm:$0xff]
        %v375 = vld [vmem:[%s289 + $0x18] sm:$0xff]
        %v376 = vld [vmem:[%s289 + $0x20] sm:$0xff]
        %v377 = vld [vmem:[%s289 + $0x28] sm:$0xff]
        %v378 = vld [vmem:[%s289 + $0x30] sm:$0xff]
        %v379 = vld [vmem:[%s289 + $0x38] sm:$0xff]
        %v381 = vcombine.high %v371, %v371
        %vm383 = vcmask 1043456
        %v384 = vsel %vm383, %v371, 0.0
        %v385 = vsel %vm383, %v381, 0.0
        %396 = vrot.lane.b32.xlu0 %v384, 17
        %v397 = vpop.permute.xlu0 %396
        %398 = vrot.lane.b32.xlu0 %v385, 17
        %v399 = vpop.permute.xlu0 %398
        %400 = vrot.lane.b32.xlu0 %v372, 17
        %v401 = vpop.permute.xlu0 %400
        %402 = vrot.lane.b32.xlu0 %v373, 17
        %v403 = vpop.permute.xlu0 %402
        %404 = vrot.lane.b32.xlu0 %v374, 17
        %v405 = vpop.permute.xlu0 %404
        %406 = vrot.lane.b32.xlu0 %v375, 17
        %v407 = vpop.permute.xlu0 %406
        %408 = vrot.lane.b32.xlu0 %v376, 17
        %v409 = vpop.permute.xlu0 %408
        %410 = vrot.lane.b32.xlu0 %v377, 17
        %v411 = vpop.permute.xlu0 %410
        %412 = vrot.lane.b32.xlu0 %v378, 17
        %v413 = vpop.permute.xlu0 %412
        %414 = vrot.lane.b32.xlu0 %v379, 17
        %v415 = vpop.permute.xlu0 %414
        %vm416 = vcmask 138240
        %v417 = vsel %vm416, %v397, %v399
        %v418 = vsel %vm416, %v401, %v403
        %v419 = vsel %vm416, %v405, %v407
        %v420 = vsel %vm416, %v409, %v411
        %v421 = vsel %vm416, %v413, %v415
        %v437 = vsel %vm416, 0.0, %v397
        %v438 = vsel %vm416, 0.0, %v401
        %v439 = vsel %vm416, 0.0, %v405
        %v440 = vsel %vm416, 0.0, %v409
        %v441 = vsel %vm416, 0.0, %v413
        %v442 = vsel %vm416, %v399, 0.0
        %v443 = vsel %vm416, %v403, 0.0
        %v444 = vsel %vm416, %v407, 0.0
        %v445 = vsel %vm416, %v411, 0.0
        %v446 = vsel %vm416, %v415, 0.0
        %vm447 = vcmp.ge.s32.totalorder %v369, 1
        %vm448 = vcmp.ge.s32.totalorder %v370, 1
        %v449 = vsel %vm447, %v437, 0.0
        %v450 = vsel %vm448, %v417, 0.0
        %v451 = vsel %vm447, %v438, 0.0
        %v452 = vsel %vm448, %v418, 0.0
        %v453 = vsel %vm447, %v439, 0.0
        %v454 = vsel %vm448, %v419, 0.0
        %v455 = vsel %vm447, %v440, 0.0
        %v456 = vsel %vm448, %v420, 0.0
        %v457 = vsel %vm447, %v441, 0.0
        %v458 = vsel %vm448, %v421, 0.0
        %vm459 = vcmp.le.s32.totalorder %v369, 14
        %vm460 = vcmp.le.s32.totalorder %v370, 14
        %471 = vrot.lane.b32.xlu0 %v437, 126
        %v472 = vpop.permute.xlu0 %471
        %473 = vrot.lane.b32.xlu0 %v417, 126
        %v474 = vpop.permute.xlu0 %473
        %475 = vrot.lane.b32.xlu0 %v442, 126
        %v476 = vpop.permute.xlu0 %475
        %477 = vrot.lane.b32.xlu0 %v438, 126
        %v478 = vpop.permute.xlu0 %477
        %479 = vrot.lane.b32.xlu0 %v418, 126
        %v480 = vpop.permute.xlu0 %479
        %481 = vrot.lane.b32.xlu0 %v443, 126
        %v482 = vpop.permute.xlu0 %481
        %483 = vrot.lane.b32.xlu0 %v439, 126
        %v484 = vpop.permute.xlu0 %483
        %485 = vrot.lane.b32.xlu0 %v419, 126
        %v486 = vpop.permute.xlu0 %485
        %487 = vrot.lane.b32.xlu0 %v444, 126
        %v488 = vpop.permute.xlu0 %487
        %489 = vrot.lane.b32.xlu0 %v440, 126
        %v490 = vpop.permute.xlu0 %489
        %491 = vrot.lane.b32.xlu0 %v420, 126
        %v492 = vpop.permute.xlu0 %491
        %493 = vrot.lane.b32.xlu0 %v445, 126
        %v494 = vpop.permute.xlu0 %493
        %495 = vrot.lane.b32.xlu0 %v441, 126
        %v496 = vpop.permute.xlu0 %495
        %497 = vrot.lane.b32.xlu0 %v421, 126
        %v498 = vpop.permute.xlu0 %497
        %499 = vrot.lane.b32.xlu0 %v446, 126
        %v500 = vpop.permute.xlu0 %499
        %vm501 = vcmask 1031168
        %v502 = vsel %vm501, %v472, %v474
        %v503 = vsel %vm501, %v474, %v476
        %v504 = vsel %vm501, %v478, %v480
        %v505 = vsel %vm501, %v480, %v482
        %v506 = vsel %vm501, %v484, %v486
        %v507 = vsel %vm501, %v486, %v488
        %v508 = vsel %vm501, %v490, %v492
        %v509 = vsel %vm501, %v492, %v494
        %v510 = vsel %vm501, %v496, %v498
        %v511 = vsel %vm501, %v498, %v500
        %v522 = vsel %vm459, %v502, 0.0
        %v523 = vsel %vm460, %v503, 0.0
        %v524 = vsel %vm459, %v504, 0.0
        %v525 = vsel %vm460, %v505, 0.0
        %v526 = vsel %vm459, %v506, 0.0
        %v527 = vsel %vm460, %v507, 0.0
        %v528 = vsel %vm459, %v508, 0.0
        %v529 = vsel %vm460, %v509, 0.0
        %v530 = vsel %vm459, %v510, 0.0
        %v531 = vsel %vm460, %v511, 0.0
        %532 = vrot.lane.b32.xlu0 %v437, 112
        %v533 = vpop.permute.xlu0 %532
        %534 = vrot.lane.b32.xlu0 %v417, 112
        %v535 = vpop.permute.xlu0 %534
        %536 = vrot.lane.b32.xlu0 %v442, 112
        %v537 = vpop.permute.xlu0 %536
        %538 = vrot.lane.b32.xlu0 %v438, 112
        %v539 = vpop.permute.xlu0 %538
        %540 = vrot.lane.b32.xlu0 %v418, 112
        %v541 = vpop.permute.xlu0 %540
        %542 = vrot.lane.b32.xlu0 %v443, 112
        %v543 = vpop.permute.xlu0 %542
        %544 = vrot.lane.b32.xlu0 %v439, 112
        %v545 = vpop.permute.xlu0 %544
        %546 = vrot.lane.b32.xlu0 %v419, 112
        %v547 = vpop.permute.xlu0 %546
        %548 = vrot.lane.b32.xlu0 %v444, 112
        %v549 = vpop.permute.xlu0 %548
        %550 = vrot.lane.b32.xlu0 %v440, 112
        %v551 = vpop.permute.xlu0 %550
        %552 = vrot.lane.b32.xlu0 %v420, 112
        %v553 = vpop.permute.xlu0 %552
        %554 = vrot.lane.b32.xlu0 %v445, 112
        %v555 = vpop.permute.xlu0 %554
        %556 = vrot.lane.b32.xlu0 %v441, 112
        %v557 = vpop.permute.xlu0 %556
        %558 = vrot.lane.b32.xlu0 %v421, 112
        %v559 = vpop.permute.xlu0 %558
        %560 = vrot.lane.b32.xlu0 %v446, 112
        %v561 = vpop.permute.xlu0 %560
        %vm562 = vcmask 916480
        %v563 = vsel %vm562, %v533, %v535
        %v564 = vsel %vm562, %v535, %v537
        %v565 = vsel %vm562, %v539, %v541
        %v566 = vsel %vm562, %v541, %v543
        %v567 = vsel %vm562, %v545, %v547
        %v568 = vsel %vm562, %v547, %v549
        %v569 = vsel %vm562, %v551, %v553
        %v570 = vsel %vm562, %v553, %v555
        %v571 = vsel %vm562, %v557, %v559
        %v572 = vsel %vm562, %v559, %v561
        %v583 = vsel %vm447, %v563, 0.0
        %v584 = vsel %vm448, %v564, 0.0
        %v585 = vsel %vm447, %v565, 0.0
        %v586 = vsel %vm448, %v566, 0.0
        %v587 = vsel %vm447, %v567, 0.0
        %v588 = vsel %vm448, %v568, 0.0
        %v589 = vsel %vm447, %v569, 0.0
        %v590 = vsel %vm448, %v570, 0.0
        %v591 = vsel %vm447, %v571, 0.0
        %v592 = vsel %vm448, %v572, 0.0
        %593 = vrot.lane.b32.xlu0 %v437, 110
        %v594 = vpop.permute.xlu0 %593
        %595 = vrot.lane.b32.xlu0 %v417, 110
        %v596 = vpop.permute.xlu0 %595
        %597 = vrot.lane.b32.xlu0 %v442, 110
        %v598 = vpop.permute.xlu0 %597
        %599 = vrot.lane.b32.xlu0 %v438, 110
        %v600 = vpop.permute.xlu0 %599
        %601 = vrot.lane.b32.xlu0 %v418, 110
        %v602 = vpop.permute.xlu0 %601
        %603 = vrot.lane.b32.xlu0 %v443, 110
        %v604 = vpop.permute.xlu0 %603
        %605 = vrot.lane.b32.xlu0 %v439, 110
        %v606 = vpop.permute.xlu0 %605
        %607 = vrot.lane.b32.xlu0 %v419, 110
        %v608 = vpop.permute.xlu0 %607
        %609 = vrot.lane.b32.xlu0 %v444, 110
        %v610 = vpop.permute.xlu0 %609
        %611 = vrot.lane.b32.xlu0 %v440, 110
        %v612 = vpop.permute.xlu0 %611
        %613 = vrot.lane.b32.xlu0 %v420, 110
        %v614 = vpop.permute.xlu0 %613
        %615 = vrot.lane.b32.xlu0 %v445, 110
        %v616 = vpop.permute.xlu0 %615
        %617 = vrot.lane.b32.xlu0 %v441, 110
        %v618 = vpop.permute.xlu0 %617
        %619 = vrot.lane.b32.xlu0 %v421, 110
        %v620 = vpop.permute.xlu0 %619
        %621 = vrot.lane.b32.xlu0 %v446, 110
        %v622 = vpop.permute.xlu0 %621
        %vm623 = vcmask 900096
        %v624 = vsel %vm623, %v594, %v596
        %v625 = vsel %vm623, %v596, %v598
        %v626 = vsel %vm623, %v600, %v602
        %v627 = vsel %vm623, %v602, %v604
        %v628 = vsel %vm623, %v606, %v608
        %v629 = vsel %vm623, %v608, %v610
        %v630 = vsel %vm623, %v612, %v614
        %v631 = vsel %vm623, %v614, %v616
        %v632 = vsel %vm623, %v618, %v620
        %v633 = vsel %vm623, %v620, %v622
        %v644 = vsel %vm459, %v624, 0.0
        %v645 = vsel %vm460, %v625, 0.0
        %v646 = vsel %vm459, %v626, 0.0
        %v647 = vsel %vm460, %v627, 0.0
        %v648 = vsel %vm459, %v628, 0.0
        %v649 = vsel %vm460, %v629, 0.0
        %v650 = vsel %vm459, %v630, 0.0
        %v651 = vsel %vm460, %v631, 0.0
        %v652 = vsel %vm459, %v632, 0.0
        %v653 = vsel %vm460, %v633, 0.0
        %654 = vrot.lane.b32.xlu0 %v437, 96
        %v655 = vpop.permute.xlu0 %654
        %656 = vrot.lane.b32.xlu0 %v417, 96
        %v657 = vpop.permute.xlu0 %656
        %658 = vrot.lane.b32.xlu0 %v442, 96
        %v659 = vpop.permute.xlu0 %658
        %660 = vrot.lane.b32.xlu0 %v438, 96
        %v661 = vpop.permute.xlu0 %660
        %662 = vrot.lane.b32.xlu0 %v418, 96
        %v663 = vpop.permute.xlu0 %662
        %664 = vrot.lane.b32.xlu0 %v443, 96
        %v665 = vpop.permute.xlu0 %664
        %666 = vrot.lane.b32.xlu0 %v439, 96
        %v667 = vpop.permute.xlu0 %666
        %668 = vrot.lane.b32.xlu0 %v419, 96
        %v669 = vpop.permute.xlu0 %668
        %670 = vrot.lane.b32.xlu0 %v444, 96
        %v671 = vpop.permute.xlu0 %670
        %672 = vrot.lane.b32.xlu0 %v440, 96
        %v673 = vpop.permute.xlu0 %672
        %674 = vrot.lane.b32.xlu0 %v420, 96
        %v675 = vpop.permute.xlu0 %674
        %676 = vrot.lane.b32.xlu0 %v445, 96
        %v677 = vpop.permute.xlu0 %676
        %678 = vrot.lane.b32.xlu0 %v441, 96
        %v679 = vpop.permute.xlu0 %678
        %680 = vrot.lane.b32.xlu0 %v421, 96
        %v681 = vpop.permute.xlu0 %680
        %682 = vrot.lane.b32.xlu0 %v446, 96
        %v683 = vpop.permute.xlu0 %682
        %vm684 = vcmask 785408
        %v685 = vsel %vm684, %v655, %v657
        %v686 = vsel %vm684, %v657, %v659
        %v687 = vsel %vm684, %v661, %v663
        %v688 = vsel %vm684, %v663, %v665
        %v689 = vsel %vm684, %v667, %v669
        %v690 = vsel %vm684, %v669, %v671
        %v691 = vsel %vm684, %v673, %v675
        %v692 = vsel %vm684, %v675, %v677
        %v693 = vsel %vm684, %v679, %v681
        %v694 = vsel %vm684, %v681, %v683
        %v705 = vsel %vm447, %v685, 0.0
        %v706 = vsel %vm448, %v686, 0.0
        %v707 = vsel %vm447, %v687, 0.0
        %v708 = vsel %vm448, %v688, 0.0
        %v709 = vsel %vm447, %v689, 0.0
        %v710 = vsel %vm448, %v690, 0.0
        %v711 = vsel %vm447, %v691, 0.0
        %v712 = vsel %vm448, %v692, 0.0
        %v713 = vsel %vm447, %v693, 0.0
        %v714 = vsel %vm448, %v694, 0.0
        %715 = vrot.lane.b32.xlu0 %v437, 94
        %v716 = vpop.permute.xlu0 %715
        %717 = vrot.lane.b32.xlu0 %v417, 94
        %v718 = vpop.permute.xlu0 %717
        %719 = vrot.lane.b32.xlu0 %v442, 94
        %v720 = vpop.permute.xlu0 %719
        %721 = vrot.lane.b32.xlu0 %v438, 94
        %v722 = vpop.permute.xlu0 %721
        %723 = vrot.lane.b32.xlu0 %v418, 94
        %v724 = vpop.permute.xlu0 %723
        %725 = vrot.lane.b32.xlu0 %v443, 94
        %v726 = vpop.permute.xlu0 %725
        %727 = vrot.lane.b32.xlu0 %v439, 94
        %v728 = vpop.permute.xlu0 %727
        %729 = vrot.lane.b32.xlu0 %v419, 94
        %v730 = vpop.permute.xlu0 %729
        %731 = vrot.lane.b32.xlu0 %v444, 94
        %v732 = vpop.permute.xlu0 %731
        %733 = vrot.lane.b32.xlu0 %v440, 94
        %v734 = vpop.permute.xlu0 %733
        %735 = vrot.lane.b32.xlu0 %v420, 94
        %v736 = vpop.permute.xlu0 %735
        %737 = vrot.lane.b32.xlu0 %v445, 94
        %v738 = vpop.permute.xlu0 %737
        %739 = vrot.lane.b32.xlu0 %v441, 94
        %v740 = vpop.permute.xlu0 %739
        %741 = vrot.lane.b32.xlu0 %v421, 94
        %v742 = vpop.permute.xlu0 %741
        %743 = vrot.lane.b32.xlu0 %v446, 94
        %v744 = vpop.permute.xlu0 %743
        %vm745 = vcmask 769024
        %v746 = vsel %vm745, %v716, %v718
        %v747 = vsel %vm745, %v718, %v720
        %v748 = vsel %vm745, %v722, %v724
        %v749 = vsel %vm745, %v724, %v726
        %v750 = vsel %vm745, %v728, %v730
        %v751 = vsel %vm745, %v730, %v732
        %v752 = vsel %vm745, %v734, %v736
        %v753 = vsel %vm745, %v736, %v738
        %v754 = vsel %vm745, %v740, %v742
        %v755 = vsel %vm745, %v742, %v744
        %v766 = vsel %vm459, %v746, 0.0
        %v767 = vsel %vm460, %v747, 0.0
        %v768 = vsel %vm459, %v748, 0.0
        %v769 = vsel %vm460, %v749, 0.0
        %v770 = vsel %vm459, %v750, 0.0
        %v771 = vsel %vm460, %v751, 0.0
        %v772 = vsel %vm459, %v752, 0.0
        %v773 = vsel %vm460, %v753, 0.0
        %v774 = vsel %vm459, %v754, 0.0
        %v775 = vsel %vm460, %v755, 0.0
        %776 = vrot.lane.b32.xlu0 %v437, 127
        %v777 = vpop.permute.xlu0 %776
        %778 = vrot.lane.b32.xlu0 %v417, 127
        %v779 = vpop.permute.xlu0 %778
        %780 = vrot.lane.b32.xlu0 %v442, 127
        %v781 = vpop.permute.xlu0 %780
        %782 = vrot.lane.b32.xlu0 %v438, 127
        %v783 = vpop.permute.xlu0 %782
        %784 = vrot.lane.b32.xlu0 %v418, 127
        %v785 = vpop.permute.xlu0 %784
        %786 = vrot.lane.b32.xlu0 %v443, 127
        %v787 = vpop.permute.xlu0 %786
        %788 = vrot.lane.b32.xlu0 %v439, 127
        %v789 = vpop.permute.xlu0 %788
        %790 = vrot.lane.b32.xlu0 %v419, 127
        %v791 = vpop.permute.xlu0 %790
        %792 = vrot.lane.b32.xlu0 %v444, 127
        %v793 = vpop.permute.xlu0 %792
        %794 = vrot.lane.b32.xlu0 %v440, 127
        %v795 = vpop.permute.xlu0 %794
        %796 = vrot.lane.b32.xlu0 %v420, 127
        %v797 = vpop.permute.xlu0 %796
        %798 = vrot.lane.b32.xlu0 %v445, 127
        %v799 = vpop.permute.xlu0 %798
        %800 = vrot.lane.b32.xlu0 %v441, 127
        %v801 = vpop.permute.xlu0 %800
        %802 = vrot.lane.b32.xlu0 %v421, 127
        %v803 = vpop.permute.xlu0 %802
        %804 = vrot.lane.b32.xlu0 %v446, 127
        %v805 = vpop.permute.xlu0 %804
        %vm806 = vcmask 1039360
        %v807 = vsel %vm806, %v777, %v779
        %v808 = vsel %vm806, %v779, %v781
        %v809 = vsel %vm806, %v783, %v785
        %v810 = vsel %vm806, %v785, %v787
        %v811 = vsel %vm806, %v789, %v791
        %v812 = vsel %vm806, %v791, %v793
        %v813 = vsel %vm806, %v795, %v797
        %v814 = vsel %vm806, %v797, %v799
        %v815 = vsel %vm806, %v801, %v803
        %v816 = vsel %vm806, %v803, %v805
        %827 = vrot.lane.b32.xlu0 %v437, 111
        %v828 = vpop.permute.xlu0 %827
        %829 = vrot.lane.b32.xlu0 %v417, 111
        %v830 = vpop.permute.xlu0 %829
        %831 = vrot.lane.b32.xlu0 %v442, 111
        %v832 = vpop.permute.xlu0 %831
        %833 = vrot.lane.b32.xlu0 %v438, 111
        %v834 = vpop.permute.xlu0 %833
        %835 = vrot.lane.b32.xlu0 %v418, 111
        %v836 = vpop.permute.xlu0 %835
        %837 = vrot.lane.b32.xlu0 %v443, 111
        %v838 = vpop.permute.xlu0 %837
        %839 = vrot.lane.b32.xlu0 %v439, 111
        %v840 = vpop.permute.xlu0 %839
        %841 = vrot.lane.b32.xlu0 %v419, 111
        %v842 = vpop.permute.xlu0 %841
        %843 = vrot.lane.b32.xlu0 %v444, 111
        %v844 = vpop.permute.xlu0 %843
        %845 = vrot.lane.b32.xlu0 %v440, 111
        %v846 = vpop.permute.xlu0 %845
        %847 = vrot.lane.b32.xlu0 %v420, 111
        %v848 = vpop.permute.xlu0 %847
        %849 = vrot.lane.b32.xlu0 %v445, 111
        %v850 = vpop.permute.xlu0 %849
        %851 = vrot.lane.b32.xlu0 %v441, 111
        %v852 = vpop.permute.xlu0 %851
        %853 = vrot.lane.b32.xlu0 %v421, 111
        %v854 = vpop.permute.xlu0 %853
        %855 = vrot.lane.b32.xlu0 %v446, 111
        %v856 = vpop.permute.xlu0 %855
        %vm857 = vcmask 908288
        %v858 = vsel %vm857, %v828, %v830
        %v859 = vsel %vm857, %v830, %v832
        %v860 = vsel %vm857, %v834, %v836
        %v861 = vsel %vm857, %v836, %v838
        %v862 = vsel %vm857, %v840, %v842
        %v863 = vsel %vm857, %v842, %v844
        %v864 = vsel %vm857, %v846, %v848
        %v865 = vsel %vm857, %v848, %v850
        %v866 = vsel %vm857, %v852, %v854
        %v867 = vsel %vm857, %v854, %v856
        %878 = vrot.lane.b32.xlu0 %v437, 95
        %v879 = vpop.permute.xlu0 %878
        %880 = vrot.lane.b32.xlu0 %v417, 95
        %v881 = vpop.permute.xlu0 %880
        %882 = vrot.lane.b32.xlu0 %v442, 95
        %v883 = vpop.permute.xlu0 %882
        %884 = vrot.lane.b32.xlu0 %v438, 95
        %v885 = vpop.permute.xlu0 %884
        %886 = vrot.lane.b32.xlu0 %v418, 95
        %v887 = vpop.permute.xlu0 %886
        %888 = vrot.lane.b32.xlu0 %v443, 95
        %v889 = vpop.permute.xlu0 %888
        %890 = vrot.lane.b32.xlu0 %v439, 95
        %v891 = vpop.permute.xlu0 %890
        %892 = vrot.lane.b32.xlu0 %v419, 95
        %v893 = vpop.permute.xlu0 %892
        %894 = vrot.lane.b32.xlu0 %v444, 95
        %v895 = vpop.permute.xlu0 %894
        %896 = vrot.lane.b32.xlu0 %v440, 95
        %v897 = vpop.permute.xlu0 %896
        %898 = vrot.lane.b32.xlu0 %v420, 95
        %v899 = vpop.permute.xlu0 %898
        %900 = vrot.lane.b32.xlu0 %v445, 95
        %v901 = vpop.permute.xlu0 %900
        %902 = vrot.lane.b32.xlu0 %v441, 95
        %v903 = vpop.permute.xlu0 %902
        %904 = vrot.lane.b32.xlu0 %v421, 95
        %v905 = vpop.permute.xlu0 %904
        %906 = vrot.lane.b32.xlu0 %v446, 95
        %v907 = vpop.permute.xlu0 %906
        %vm908 = vcmask 777216
        %v909 = vsel %vm908, %v879, %v881
        %v910 = vsel %vm908, %v881, %v883
        %v911 = vsel %vm908, %v885, %v887
        %v912 = vsel %vm908, %v887, %v889
        %v913 = vsel %vm908, %v891, %v893
        %v914 = vsel %vm908, %v893, %v895
        %v915 = vsel %vm908, %v897, %v899
        %v916 = vsel %vm908, %v899, %v901
        %v917 = vsel %vm908, %v903, %v905
        %v918 = vsel %vm908, %v905, %v907
        %vm929 = vcmask 1040384
        %v930 = vsel %vm929, 1.0, 0.0
        %v931 = vld [vmem:[#allocation8] sm:$0xff]
        %v932 = vld [vmem:[#allocation8 + $0x8] sm:$0xff]
        %v933 = vld [vmem:[#allocation8 + $0x10] sm:$0xff]
        %v934 = vld [vmem:[#allocation8 + $0x18] sm:$0xff]
        %v935 = vld [vmem:[#allocation8 + $0x20] sm:$0xff]
        %v936 = vld [vmem:[#allocation8 + $0x28] sm:$0xff]
        %v937 = vld [vmem:[#allocation8 + $0x30] sm:$0xff]
        %v938 = vld [vmem:[#allocation8 + $0x38] sm:$0xff]
        %v939 = vld [vmem:[#allocation8 + $0x40] sm:$0xff]
        %v940 = vld [vmem:[#allocation8 + $0x48] sm:$0xff]
        %v941 = vld [vmem:[#allocation8 + $0x50] sm:$0xff]
        %v942 = vld [vmem:[#allocation8 + $0x58] sm:$0xff]
        %v943 = vld [vmem:[#allocation8 + $0x60] sm:$0xff]
        %v944 = vld [vmem:[#allocation8 + $0x68] sm:$0xff]
        %v945 = vld [vmem:[#allocation8 + $0x70] sm:$0xff]
        %v946 = vld [vmem:[#allocation8 + $0x78] sm:$0xff]
        %v947 = vld [vmem:[#allocation8 + $0x80] sm:$0xff]
        %v948 = vld [vmem:[#allocation8 + $0x88] sm:$0xff]
        %v949 = vld [vmem:[#allocation8 + $0x90] sm:$0xff]
        %v950 = vld [vmem:[#allocation8 + $0x98] sm:$0xff]
        %v951 = vld [vmem:[#allocation8 + $0xa0] sm:$0xff]
        %v952 = vld [vmem:[#allocation8 + $0xa8] sm:$0xff]
        %v953 = vld [vmem:[#allocation8 + $0xb0] sm:$0xff]
        %v954 = vld [vmem:[#allocation8 + $0xb8] sm:$0xff]
        %v955 = vld [vmem:[#allocation8 + $0xc0] sm:$0xff]
        %v956 = vld [vmem:[#allocation8 + $0xc8] sm:$0xff]
        %v957 = vld [vmem:[#allocation8 + $0xd0] sm:$0xff]
        %v958 = vld [vmem:[#allocation8 + $0xd8] sm:$0xff]
        %v959 = vld [vmem:[#allocation8 + $0xe0] sm:$0xff]
        %v960 = vld [vmem:[#allocation8 + $0xe8] sm:$0xff]
        %v961 = vld [vmem:[#allocation8 + $0xf0] sm:$0xff]
        %v962 = vld [vmem:[#allocation8 + $0xf8] sm:$0xff]
        %v963 = vld [vmem:[#allocation8 + $0x100] sm:$0xff]
        %v964 = vld [vmem:[#allocation8 + $0x108] sm:$0xff]
        %v965 = vld [vmem:[#allocation8 + $0x110] sm:$0xff]
        %v966 = vld [vmem:[#allocation8 + $0x118] sm:$0xff]
        %v967 = vld [vmem:[#allocation8 + $0x120] sm:$0xff]
        %v968 = vld [vmem:[#allocation8 + $0x128] sm:$0xff]
        %v969 = vld [vmem:[#allocation8 + $0x130] sm:$0xff]
        %v970 = vld [vmem:[#allocation8 + $0x138] sm:$0xff]
        %v971 = vld [vmem:[#allocation8 + $0x140] sm:$0xff]
        %v972 = vld [vmem:[#allocation8 + $0x148] sm:$0xff]
        %v973 = vld [vmem:[#allocation8 + $0x150] sm:$0xff]
        %v974 = vld [vmem:[#allocation8 + $0x158] sm:$0xff]
        %v975 = vld [vmem:[#allocation8 + $0x160] sm:$0xff]
        %v976 = vld [vmem:[#allocation8 + $0x168] sm:$0xff]
        %v977 = vld [vmem:[#allocation8 + $0x170] sm:$0xff]
        %v978 = vld [vmem:[#allocation8 + $0x178] sm:$0xff]
        %979 = vmatprep.subr.mxu0 %v584
        %980 = vmatpush1.msra.mxu0 %v583
        %981 = vmatprep.subr.mxu0 %v531
        %982 = vmatpush1.msra.mxu0 %v530
        %983 = vmatprep.subr.mxu0 %v529
        %984 = vmatpush1.msra.mxu0 %v528
        %985 = vmatprep.subr.mxu0 %v527
        %986 = vmatpush1.msra.mxu0 %v526
        %987 = vmatprep.subr.mxu0 %v525
        %988 = vmatpush1.msra.mxu0 %v524
        %989 = vmatprep.subr.mxu0 %v523
        %990 = vmatpush1.msra.mxu0 %v522
        %991 = vmatprep.subr.mxu0 %v816
        %992 = vmatpush1.msra.mxu0 %v815
        %993 = vmatprep.subr.mxu0 %v814
        %994 = vmatpush1.msra.mxu0 %v813
        %995 = vmatprep.subr.mxu0 %v812
        %996 = vmatpush1.msra.mxu0 %v811
        %997 = vmatprep.subr.mxu0 %v810
        %998 = vmatpush1.msra.mxu0 %v809
        %999 = vmatprep.subr.mxu0 %v808
        %1000 = vmatpush1.msra.mxu0 %v807
        %1001 = vmatprep.subr.mxu0 %v458
        %1002 = vmatpush1.msra.mxu0 %v457
        %1003 = vmatprep.subr.mxu0 %v456
        %1004 = vmatpush1.msra.mxu0 %v455
        %1005 = vmatprep.subr.mxu0 %v454
        %1006 = vmatpush1.msra.mxu0 %v453
        %1007 = vmatprep.subr.mxu0 %v452
        %1008 = vmatpush1.msra.mxu0 %v451
        %1009 = vmatprep.subr.mxu0 %v450
        %1010 = vmatpush1.msra.mxu0 %v449
        %1011 = vmatprep.subr.mxu0 %v708
        %1012 = vmatpush2.msra.mxu0 %v707
        %1013 = vmatprep.subr.mxu0 %v706
        %1014 = vmatpush2.msra.mxu0 %v705
        %1015 = vmatprep.subr.mxu0 %v653
        %1016 = vmatpush2.msra.mxu0 %v652
        %1017 = vmatprep.subr.mxu0 %v651
        %1018 = vmatpush2.msra.mxu0 %v650
        %1019 = vmatprep.subr.mxu0 %v649
        %1020 = vmatpush2.msra.mxu0 %v648
        %1021 = vmatprep.subr.mxu0 %v647
        %1022 = vmatpush2.msra.mxu0 %v646
        %1023 = vmatprep.subr.mxu0 %v645
        %1024 = vmatpush2.msra.mxu0 %v644
        %1025 = vmatprep.subr.mxu0 %v867
        %1026 = vmatpush2.msra.mxu0 %v866
        %1027 = vmatprep.subr.mxu0 %v865
        %1028 = vmatpush2.msra.mxu0 %v864
        %1029 = vmatprep.subr.mxu0 %v863
        %1030 = vmatpush2.msra.mxu0 %v862
        %1031 = vmatprep.subr.mxu0 %v861
        %1032 = vmatpush2.msra.mxu0 %v860
        %1033 = vmatprep.subr.mxu0 %v859
        %1034 = vmatpush2.msra.mxu0 %v858
        %1035 = vmatprep.subr.mxu0 %v592
        %1036 = vmatpush2.msra.mxu0 %v591
        %1037 = vmatprep.subr.mxu0 %v590
        %1038 = vmatpush2.msra.mxu0 %v589
        %1039 = vmatprep.subr.mxu0 %v588
        %1040 = vmatpush2.msra.mxu0 %v587
        %1041 = vmatprep.subr.mxu0 %v586
        %1042 = vmatpush2.msra.mxu0 %v585
        %1043 = vmatprep.mubr.f32.mxu0 %v932
        %1044 = vmatmul.mubr.f32.gmra.mxu0 %v931
        %v1045 = vpop.f32.mrf.mxu0
        %v1046 = vadd.f32 0.0, %v1045
        %v1047 = vpop.f32.mrf.mxu0
        %v1048 = vadd.f32 0.0, %v1047
        %1049 = vmatprep.mubr.f32.mxu0 %v935
        %1050 = vmatmul.mubr.f32.gmra.mxu0 %v934
        %v1051 = vpop.f32.mrf.mxu0
        %v1052 = vadd.f32 0.0, %v1051
        %v1053 = vpop.f32.mrf.mxu0
        %v1054 = vadd.f32 0.0, %v1053
        %1055 = vmatprep.mubr.f32.mxu0 %v938
        %1056 = vmatmul.mubr.f32.gmra.mxu0 %v937
        %v1057 = vpop.f32.mrf.mxu0
        %v1058 = vadd.f32 0.0, %v1057
        %v1059 = vpop.f32.mrf.mxu0
        %v1060 = vadd.f32 0.0, %v1059
        %1061 = vmatprep.mubr.f32.mxu0 %v941
        %1062 = vmatmul.mubr.f32.gmra.mxu0 %v940
        %v1063 = vpop.f32.mrf.mxu0
        %v1064 = vadd.f32 0.0, %v1063
        %v1065 = vpop.f32.mrf.mxu0
        %v1066 = vadd.f32 0.0, %v1065
        %1067 = vmatprep.mubr.f32.mxu0 %v944
        %1068 = vmatmul.mubr.f32.gmra.mxu0 %v943
        %v1069 = vpop.f32.mrf.mxu0
        %v1070 = vadd.f32 0.0, %v1069
        %v1071 = vpop.f32.mrf.mxu0
        %v1072 = vadd.f32 0.0, %v1071
        %1073 = vmatprep.mubr.f32.mxu0 %v947
        %1074 = vmatmul.mubr.f32.gmra.mxu0 %v946
        %v1075 = vpop.f32.mrf.mxu0
        %v1076 = vadd.f32 0.0, %v1075
        %v1077 = vpop.f32.mrf.mxu0
        %v1078 = vadd.f32 0.0, %v1077
        %1079 = vmatprep.mubr.f32.mxu0 %v950
        %1080 = vmatmul.mubr.f32.gmra.mxu0 %v949
        %v1081 = vpop.f32.mrf.mxu0
        %v1082 = vadd.f32 0.0, %v1081
        %v1083 = vpop.f32.mrf.mxu0
        %v1084 = vadd.f32 0.0, %v1083
        %1085 = vmatprep.mubr.f32.mxu0 %v953
        %1086 = vmatmul.mubr.f32.gmra.mxu0 %v952
        %v1087 = vpop.f32.mrf.mxu0
        %v1088 = vadd.f32 0.0, %v1087
        %v1089 = vpop.f32.mrf.mxu0
        %v1090 = vadd.f32 0.0, %v1089
        %1091 = vmatprep.mubr.f32.mxu0 %v956
        %1092 = vmatmul.mubr.f32.gmra.mxu0 %v955
        %v1093 = vpop.f32.mrf.mxu0
        %v1094 = vadd.f32 0.0, %v1093
        %v1095 = vpop.f32.mrf.mxu0
        %v1096 = vadd.f32 0.0, %v1095
        %1097 = vmatprep.mubr.f32.mxu0 %v959
        %1098 = vmatmul.mubr.f32.gmra.mxu0 %v958
        %v1099 = vpop.f32.mrf.mxu0
        %v1100 = vadd.f32 0.0, %v1099
        %v1101 = vpop.f32.mrf.mxu0
        %v1102 = vadd.f32 0.0, %v1101
        %1103 = vmatprep.mubr.f32.mxu0 %v962
        %1104 = vmatmul.mubr.f32.gmra.mxu0 %v961
        %v1105 = vpop.f32.mrf.mxu0
        %v1106 = vadd.f32 0.0, %v1105
        %v1107 = vpop.f32.mrf.mxu0
        %v1108 = vadd.f32 0.0, %v1107
        %1109 = vmatprep.mubr.f32.mxu0 %v965
        %1110 = vmatmul.mubr.f32.gmra.mxu0 %v964
        %v1111 = vpop.f32.mrf.mxu0
        %v1112 = vadd.f32 0.0, %v1111
        %v1113 = vpop.f32.mrf.mxu0
        %v1114 = vadd.f32 0.0, %v1113
        %1115 = vmatprep.mubr.f32.mxu0 %v968
        %1116 = vmatmul.mubr.f32.gmra.mxu0 %v967
        %v1117 = vpop.f32.mrf.mxu0
        %v1118 = vadd.f32 0.0, %v1117
        %v1119 = vpop.f32.mrf.mxu0
        %v1120 = vadd.f32 0.0, %v1119
        %1121 = vmatprep.mubr.f32.mxu0 %v971
        %1122 = vmatmul.mubr.f32.gmra.mxu0 %v970
        %v1123 = vpop.f32.mrf.mxu0
        %v1124 = vadd.f32 0.0, %v1123
        %v1125 = vpop.f32.mrf.mxu0
        %v1126 = vadd.f32 0.0, %v1125
        %1127 = vmatprep.mubr.f32.mxu0 %v974
        %1128 = vmatmul.mubr.f32.gmra.mxu0 %v973
        %v1129 = vpop.f32.mrf.mxu0
        %v1130 = vadd.f32 0.0, %v1129
        %v1131 = vpop.f32.mrf.mxu0
        %v1132 = vadd.f32 0.0, %v1131
        %1133 = vmatprep.mubr.f32.mxu0 %v977
        %1134 = vmatmul.mubr.f32.gmra.mxu0 %v976
        %v1135 = vpop.f32.mrf.mxu0
        %v1136 = vadd.f32 0.0, %v1135
        %v1137 = vpop.f32.mrf.mxu0
        %v1138 = vadd.f32 0.0, %v1137
        %1139 = vdwg.mxu0
        %1140 = vmatprep.subr.mxu0 0.0
        %1141 = vmatpush1.msra.mxu0 0.0
        %1142 = vmatprep.subr.mxu0 0.0
        %1143 = vmatpush1.msra.mxu0 0.0
        %1144 = vmatprep.subr.mxu0 %v930
        %1145 = vmatpush1.msra.mxu0 %v930
        %1146 = vmatprep.subr.mxu0 %v775
        %1147 = vmatpush1.msra.mxu0 %v774
        %1148 = vmatprep.subr.mxu0 %v773
        %1149 = vmatpush1.msra.mxu0 %v772
        %1150 = vmatprep.subr.mxu0 %v771
        %1151 = vmatpush1.msra.mxu0 %v770
        %1152 = vmatprep.subr.mxu0 %v769
        %1153 = vmatpush1.msra.mxu0 %v768
        %1154 = vmatprep.subr.mxu0 %v767
        %1155 = vmatpush1.msra.mxu0 %v766
        %1156 = vmatprep.subr.mxu0 %v918
        %1157 = vmatpush1.msra.mxu0 %v917
        %1158 = vmatprep.subr.mxu0 %v916
        %1159 = vmatpush1.msra.mxu0 %v915
        %1160 = vmatprep.subr.mxu0 %v914
        %1161 = vmatpush1.msra.mxu0 %v913
        %1162 = vmatprep.subr.mxu0 %v912
        %1163 = vmatpush1.msra.mxu0 %v911
        %1164 = vmatprep.subr.mxu0 %v910
        %1165 = vmatpush1.msra.mxu0 %v909
        %1166 = vmatprep.subr.mxu0 %v714
        %1167 = vmatpush1.msra.mxu0 %v713
        %1168 = vmatprep.subr.mxu0 %v712
        %1169 = vmatpush1.msra.mxu0 %v711
        %1170 = vmatprep.subr.mxu0 %v710
        %1171 = vmatpush1.msra.mxu0 %v709
        %1172 = vmatprep.subr.mxu0 0.0
        %1173 = vmatpush2.msra.mxu0 0.0
        %1174 = vmatprep.subr.mxu0 0.0
        %1175 = vmatpush2.msra.mxu0 0.0
        %1176 = vmatprep.subr.mxu0 0.0
        %1177 = vmatpush2.msra.mxu0 0.0
        %1178 = vmatprep.subr.mxu0 0.0
        %1179 = vmatpush2.msra.mxu0 0.0
        %1180 = vmatprep.subr.mxu0 0.0
        %1181 = vmatpush2.msra.mxu0 0.0
        %1182 = vmatprep.subr.mxu0 0.0
        %1183 = vmatpush2.msra.mxu0 0.0
        %1184 = vmatprep.subr.mxu0 0.0
        %1185 = vmatpush2.msra.mxu0 0.0
        %1186 = vmatprep.subr.mxu0 0.0
        %1187 = vmatpush2.msra.mxu0 0.0
        %1188 = vmatprep.subr.mxu0 0.0
        %1189 = vmatpush2.msra.mxu0 0.0
        %1190 = vmatprep.subr.mxu0 0.0
        %1191 = vmatpush2.msra.mxu0 0.0
        %1192 = vmatprep.subr.mxu0 0.0
        %1193 = vmatpush2.msra.mxu0 0.0
        %1194 = vmatprep.subr.mxu0 0.0
        %1195 = vmatpush2.msra.mxu0 0.0
        %1196 = vmatprep.subr.mxu0 0.0
        %1197 = vmatpush2.msra.mxu0 0.0
        %1198 = vmatprep.subr.mxu0 0.0
        %1199 = vmatpush2.msra.mxu0 0.0
        %1200 = vmatprep.subr.mxu0 0.0
        %1201 = vmatpush2.msra.mxu0 0.0
        %1202 = vmatprep.subr.mxu0 0.0
        %1203 = vmatpush2.msra.mxu0 0.0
        %1204 = vmatprep.mubr.f32.mxu0 0.0
        %1205 = vmatmul.mubr.f32.gmra.mxu0 %v933
        %v1206 = vpop.f32.mrf.mxu0
        %v1207 = vadd.f32 %v1046, %v1206
        %v1208 = vpop.f32.mrf.mxu0
        %v1209 = vadd.f32 %v1048, %v1208
        %1210 = vmatprep.mubr.f32.mxu0 0.0
        %1211 = vmatmul.mubr.f32.gmra.mxu0 %v936
        %v1212 = vpop.f32.mrf.mxu0
        %v1213 = vadd.f32 %v1052, %v1212
        %v1214 = vpop.f32.mrf.mxu0
        %v1215 = vadd.f32 %v1054, %v1214
        %1216 = vmatprep.mubr.f32.mxu0 0.0
        %1217 = vmatmul.mubr.f32.gmra.mxu0 %v939
        %v1218 = vpop.f32.mrf.mxu0
        %v1219 = vadd.f32 %v1058, %v1218
        %v1220 = vpop.f32.mrf.mxu0
        %v1221 = vadd.f32 %v1060, %v1220
        %1222 = vmatprep.mubr.f32.mxu0 0.0
        %1223 = vmatmul.mubr.f32.gmra.mxu0 %v942
        %v1224 = vpop.f32.mrf.mxu0
        %v1225 = vadd.f32 %v1064, %v1224
        %v1226 = vpop.f32.mrf.mxu0
        %v1227 = vadd.f32 %v1066, %v1226
        %1228 = vmatprep.mubr.f32.mxu0 0.0
        %1229 = vmatmul.mubr.f32.gmra.mxu0 %v945
        %v1230 = vpop.f32.mrf.mxu0
        %v1231 = vadd.f32 %v1070, %v1230
        %v1232 = vpop.f32.mrf.mxu0
        %v1233 = vadd.f32 %v1072, %v1232
        %1234 = vmatprep.mubr.f32.mxu0 0.0
        %1235 = vmatmul.mubr.f32.gmra.mxu0 %v948
        %v1236 = vpop.f32.mrf.mxu0
        %v1237 = vadd.f32 %v1076, %v1236
        %v1238 = vpop.f32.mrf.mxu0
        %v1239 = vadd.f32 %v1078, %v1238
        %1240 = vmatprep.mubr.f32.mxu0 0.0
        %1241 = vmatmul.mubr.f32.gmra.mxu0 %v951
        %v1242 = vpop.f32.mrf.mxu0
        %v1243 = vadd.f32 %v1082, %v1242
        %v1244 = vpop.f32.mrf.mxu0
        %v1245 = vadd.f32 %v1084, %v1244
        %1246 = vmatprep.mubr.f32.mxu0 0.0
        %1247 = vmatmul.mubr.f32.gmra.mxu0 %v954
        %v1248 = vpop.f32.mrf.mxu0
        %v1249 = vadd.f32 %v1088, %v1248
        %v1250 = vpop.f32.mrf.mxu0
        %v1251 = vadd.f32 %v1090, %v1250
        %1252 = vmatprep.mubr.f32.mxu0 0.0
        %1253 = vmatmul.mubr.f32.gmra.mxu0 %v957
        %v1254 = vpop.f32.mrf.mxu0
        %v1255 = vadd.f32 %v1094, %v1254
        %v1256 = vpop.f32.mrf.mxu0
        %v1257 = vadd.f32 %v1096, %v1256
        %1258 = vmatprep.mubr.f32.mxu0 0.0
        %1259 = vmatmul.mubr.f32.gmra.mxu0 %v960
        %v1260 = vpop.f32.mrf.mxu0
        %v1261 = vadd.f32 %v1100, %v1260
        %v1262 = vpop.f32.mrf.mxu0
        %v1263 = vadd.f32 %v1102, %v1262
        %1264 = vmatprep.mubr.f32.mxu0 0.0
        %1265 = vmatmul.mubr.f32.gmra.mxu0 %v963
        %v1266 = vpop.f32.mrf.mxu0
        %v1267 = vadd.f32 %v1106, %v1266
        %v1268 = vpop.f32.mrf.mxu0
        %v1269 = vadd.f32 %v1108, %v1268
        %1270 = vmatprep.mubr.f32.mxu0 0.0
        %1271 = vmatmul.mubr.f32.gmra.mxu0 %v966
        %v1272 = vpop.f32.mrf.mxu0
        %v1273 = vadd.f32 %v1112, %v1272
        %v1274 = vpop.f32.mrf.mxu0
        %v1275 = vadd.f32 %v1114, %v1274
        %1276 = vmatprep.mubr.f32.mxu0 0.0
        %1277 = vmatmul.mubr.f32.gmra.mxu0 %v969
        %v1278 = vpop.f32.mrf.mxu0
        %v1279 = vadd.f32 %v1118, %v1278
        %v1280 = vpop.f32.mrf.mxu0
        %v1281 = vadd.f32 %v1120, %v1280
        %1282 = vmatprep.mubr.f32.mxu0 0.0
        %1283 = vmatmul.mubr.f32.gmra.mxu0 %v972
        %v1284 = vpop.f32.mrf.mxu0
        %v1285 = vadd.f32 %v1124, %v1284
        %v1286 = vpop.f32.mrf.mxu0
        %v1287 = vadd.f32 %v1126, %v1286
        %1288 = vmatprep.mubr.f32.mxu0 0.0
        %1289 = vmatmul.mubr.f32.gmra.mxu0 %v975
        %v1290 = vpop.f32.mrf.mxu0
        %v1291 = vadd.f32 %v1130, %v1290
        %v1292 = vpop.f32.mrf.mxu0
        %v1293 = vadd.f32 %v1132, %v1292
        %1294 = vmatprep.mubr.f32.mxu0 0.0
        %1295 = vmatmul.mubr.f32.gmra.mxu0 %v978
        %v1296 = vpop.f32.mrf.mxu0
        %v1297 = vadd.f32 %v1136, %v1296
        %v1298 = vpop.f32.mrf.mxu0
        %v1299 = vadd.f32 %v1138, %v1298
        %1300 = vdwg.mxu0
        %v1301 = vxor.u32 %v1207, 2147483648
        %v1302 = vxor.u32 %v1209, 2147483648
        %v1303 = vxor.u32 %v1213, 2147483648
        %v1304 = vxor.u32 %v1215, 2147483648
        %v1305 = vxor.u32 %v1219, 2147483648
        %v1306 = vxor.u32 %v1221, 2147483648
        %v1307 = vxor.u32 %v1225, 2147483648
        %v1308 = vxor.u32 %v1227, 2147483648
        %v1309 = vxor.u32 %v1231, 2147483648
        %v1310 = vxor.u32 %v1233, 2147483648
        %v1311 = vxor.u32 %v1237, 2147483648
        %v1312 = vxor.u32 %v1239, 2147483648
        %v1313 = vxor.u32 %v1243, 2147483648
        %v1314 = vxor.u32 %v1245, 2147483648
        %v1315 = vxor.u32 %v1249, 2147483648
        %v1316 = vxor.u32 %v1251, 2147483648
        %v1317 = vxor.u32 %v1255, 2147483648
        %v1318 = vxor.u32 %v1257, 2147483648
        %v1319 = vxor.u32 %v1261, 2147483648
        %v1320 = vxor.u32 %v1263, 2147483648
        %v1321 = vxor.u32 %v1267, 2147483648
        %v1322 = vxor.u32 %v1269, 2147483648
        %v1323 = vxor.u32 %v1273, 2147483648
        %v1324 = vxor.u32 %v1275, 2147483648
        %v1325 = vmul.f32 %v1301, 1.442695
        %v1326 = vpow.pop %v1325
        %v1327 = vmul.f32 %v1302, 1.442695
        %v1328 = vpow.pop %v1327
        %v1329 = vmul.f32 %v1303, 1.442695
        %v1330 = vpow.pop %v1329
        %v1331 = vmul.f32 %v1304, 1.442695
        %v1332 = vpow.pop %v1331
        %v1333 = vmul.f32 %v1305, 1.442695
        %v1334 = vpow.pop %v1333
        %v1335 = vmul.f32 %v1306, 1.442695
        %v1336 = vpow.pop %v1335
        %v1337 = vmul.f32 %v1307, 1.442695
        %v1338 = vpow.pop %v1337
        %v1339 = vmul.f32 %v1308, 1.442695
        %v1340 = vpow.pop %v1339
        %v1341 = vmul.f32 %v1309, 1.442695
        %v1342 = vpow.pop %v1341
        %v1343 = vmul.f32 %v1310, 1.442695
        %v1344 = vpow.pop %v1343
        %v1345 = vmul.f32 %v1311, 1.442695
        %v1346 = vpow.pop %v1345
        %v1347 = vmul.f32 %v1312, 1.442695
        %v1348 = vpow.pop %v1347
        %v1349 = vmul.f32 %v1313, 1.442695
        %v1350 = vpow.pop %v1349
        %v1351 = vmul.f32 %v1314, 1.442695
        %v1352 = vpow.pop %v1351
        %v1353 = vmul.f32 %v1315, 1.442695
        %v1354 = vpow.pop %v1353
        %v1355 = vmul.f32 %v1316, 1.442695
        %v1356 = vpow.pop %v1355
        %v1357 = vmul.f32 %v1317, 1.442695
        %v1358 = vpow.pop %v1357
        %v1359 = vmul.f32 %v1318, 1.442695
        %v1360 = vpow.pop %v1359
        %v1361 = vmul.f32 %v1319, 1.442695
        %v1362 = vpow.pop %v1361
        %v1363 = vmul.f32 %v1320, 1.442695
        %v1364 = vpow.pop %v1363
        %v1365 = vmul.f32 %v1321, 1.442695
        %v1366 = vpow.pop %v1365
        %v1367 = vmul.f32 %v1322, 1.442695
        %v1368 = vpow.pop %v1367
        %v1369 = vmul.f32 %v1323, 1.442695
        %v1370 = vpow.pop %v1369
        %v1371 = vmul.f32 %v1324, 1.442695
        %v1372 = vpow.pop %v1371
        %v1373 = vadd.f32 %v1326, 1.0
        %v1374 = vadd.f32 %v1328, 1.0
        %v1375 = vadd.f32 %v1330, 1.0
        %v1376 = vadd.f32 %v1332, 1.0
        %v1377 = vadd.f32 %v1334, 1.0
        %v1378 = vadd.f32 %v1336, 1.0
        %v1379 = vadd.f32 %v1338, 1.0
        %v1380 = vadd.f32 %v1340, 1.0
        %v1381 = vadd.f32 %v1342, 1.0
        %v1382 = vadd.f32 %v1344, 1.0
        %v1383 = vadd.f32 %v1346, 1.0
        %v1384 = vadd.f32 %v1348, 1.0
        %v1385 = vadd.f32 %v1350, 1.0
        %v1386 = vadd.f32 %v1352, 1.0
        %v1387 = vadd.f32 %v1354, 1.0
        %v1388 = vadd.f32 %v1356, 1.0
        %v1389 = vadd.f32 %v1358, 1.0
        %v1390 = vadd.f32 %v1360, 1.0
        %v1391 = vadd.f32 %v1362, 1.0
        %v1392 = vadd.f32 %v1364, 1.0
        %v1393 = vadd.f32 %v1366, 1.0
        %v1394 = vadd.f32 %v1368, 1.0
        %v1395 = vadd.f32 %v1370, 1.0
        %v1396 = vadd.f32 %v1372, 1.0
        %v1397 = vrcp.pop %v1373
        %v1398 = vmul.f32 1.0, %v1397
        %v1399 = vrcp.pop %v1374
        %v1400 = vmul.f32 1.0, %v1399
        %v1401 = vrcp.pop %v1375
        %v1402 = vmul.f32 1.0, %v1401
        %v1403 = vrcp.pop %v1376
        %v1404 = vmul.f32 1.0, %v1403
        %v1405 = vrcp.pop %v1377
        %v1406 = vmul.f32 1.0, %v1405
        %v1407 = vrcp.pop %v1378
        %v1408 = vmul.f32 1.0, %v1407
        %v1409 = vrcp.pop %v1379
        %v1410 = vmul.f32 1.0, %v1409
        %v1411 = vrcp.pop %v1380
        %v1412 = vmul.f32 1.0, %v1411
        %v1413 = vrcp.pop %v1381
        %v1414 = vmul.f32 1.0, %v1413
        %v1415 = vrcp.pop %v1382
        %v1416 = vmul.f32 1.0, %v1415
        %v1417 = vrcp.pop %v1383
        %v1418 = vmul.f32 1.0, %v1417
        %v1419 = vrcp.pop %v1384
        %v1420 = vmul.f32 1.0, %v1419
        %v1421 = vrcp.pop %v1385
        %v1422 = vmul.f32 1.0, %v1421
        %v1423 = vrcp.pop %v1386
        %v1424 = vmul.f32 1.0, %v1423
        %v1425 = vrcp.pop %v1387
        %v1426 = vmul.f32 1.0, %v1425
        %v1427 = vrcp.pop %v1388
        %v1428 = vmul.f32 1.0, %v1427
        %v1429 = vrcp.pop %v1389
        %v1430 = vmul.f32 1.0, %v1429
        %v1431 = vrcp.pop %v1390
        %v1432 = vmul.f32 1.0, %v1431
        %v1433 = vrcp.pop %v1391
        %v1434 = vmul.f32 1.0, %v1433
        %v1435 = vrcp.pop %v1392
        %v1436 = vmul.f32 1.0, %v1435
        %v1437 = vrcp.pop %v1393
        %v1438 = vmul.f32 1.0, %v1437
        %v1439 = vrcp.pop %v1394
        %v1440 = vmul.f32 1.0, %v1439
        %v1441 = vrcp.pop %v1395
        %v1442 = vmul.f32 1.0, %v1441
        %v1443 = vrcp.pop %v1396
        %v1444 = vmul.f32 1.0, %v1443
        %v1445 = vtanh.pop %v1279
        %v1446 = vtanh.pop %v1281
        %v1447 = vtanh.pop %v1285
        %v1448 = vtanh.pop %v1287
        %v1449 = vtanh.pop %v1291
        %v1450 = vtanh.pop %v1293
        %v1451 = vtanh.pop %v1297
        %v1452 = vtanh.pop %v1299
        %v1453 = vld [vmem:[%s298] sm:$0xff]
        %v1454 = vld [vmem:[%s298 + $0x8] sm:$0xff]
        %v1455 = vld [vmem:[%s298 + $0x10] sm:$0xff]
        %v1456 = vld [vmem:[%s298 + $0x18] sm:$0xff]
        %v1457 = vld [vmem:[%s298 + $0x20] sm:$0xff]
        %v1458 = vld [vmem:[%s298 + $0x28] sm:$0xff]
        %v1459 = vld [vmem:[%s298 + $0x30] sm:$0xff]
        %v1460 = vld [vmem:[%s298 + $0x38] sm:$0xff]
        %v1461 = vmul.f32 %v1414, %v1453
        %v1462 = vmul.f32 %v1416, %v1454
        %v1463 = vmul.f32 %v1418, %v1455
        %v1464 = vmul.f32 %v1420, %v1456
        %v1465 = vmul.f32 %v1422, %v1457
        %v1466 = vmul.f32 %v1424, %v1458
        %v1467 = vmul.f32 %v1426, %v1459
        %v1468 = vmul.f32 %v1428, %v1460
        %v1469 = vmul.f32 %v1398, %v1445
        %v1470 = vmul.f32 %v1400, %v1446
        %v1471 = vmul.f32 %v1402, %v1447
        %v1472 = vmul.f32 %v1404, %v1448
        %v1473 = vmul.f32 %v1406, %v1449
        %v1474 = vmul.f32 %v1408, %v1450
        %v1475 = vmul.f32 %v1410, %v1451
        %v1476 = vmul.f32 %v1412, %v1452
        %v1477 = vadd.f32 %v1461, %v1469
        %v1478 = vadd.f32 %v1462, %v1470
        %v1479 = vadd.f32 %v1463, %v1471
        %v1480 = vadd.f32 %v1464, %v1472
        %v1481 = vadd.f32 %v1465, %v1473
        %v1482 = vadd.f32 %v1466, %v1474
        %v1483 = vadd.f32 %v1467, %v1475
        %v1484 = vadd.f32 %v1468, %v1476
        %v1485 = vtanh.pop %v1477
        %v1486 = vtanh.pop %v1478
        %v1487 = vtanh.pop %v1479
        %v1488 = vtanh.pop %v1480
        %v1489 = vtanh.pop %v1481
        %v1490 = vtanh.pop %v1482
        %v1491 = vtanh.pop %v1483
        %v1492 = vtanh.pop %v1484
        %v1493 = vmul.f32 %v1430, %v1485
        %v1494 = vmul.f32 %v1432, %v1486
        %v1495 = vmul.f32 %v1434, %v1487
        %v1496 = vmul.f32 %v1436, %v1488
        %v1497 = vmul.f32 %v1438, %v1489
        %v1498 = vmul.f32 %v1440, %v1490
        %v1499 = vmul.f32 %v1442, %v1491
        %v1500 = vmul.f32 %v1444, %v1492
        %1501 = vst [vmem:[%s343] sm:$0xff] %v1477
        %1502 = vst [vmem:[%s343 + $0x8] sm:$0xff] %v1478
        %1503 = vst [vmem:[%s343 + $0x10] sm:$0xff] %v1479
        %1504 = vst [vmem:[%s343 + $0x18] sm:$0xff] %v1480
        %1505 = vst [vmem:[%s343 + $0x20] sm:$0xff] %v1481
        %1506 = vst [vmem:[%s343 + $0x28] sm:$0xff] %v1482
        %1507 = vst [vmem:[%s343 + $0x30] sm:$0xff] %v1483
        %1508 = vst [vmem:[%s343 + $0x38] sm:$0xff] %v1484
        %1509 = vst [vmem:[%s336] sm:$0xff] %v1493
        %1510 = vst [vmem:[%s336 + $0x8] sm:$0xff] %v1494
        %1511 = vst [vmem:[%s336 + $0x10] sm:$0xff] %v1495
        %1512 = vst [vmem:[%s336 + $0x18] sm:$0xff] %v1496
        %1513 = vst [vmem:[%s336 + $0x20] sm:$0xff] %v1497
        %1514 = vst [vmem:[%s336 + $0x28] sm:$0xff] %v1498
        %1515 = vst [vmem:[%s336 + $0x30] sm:$0xff] %v1499
        %1516 = vst [vmem:[%s336 + $0x38] sm:$0xff] %v1500
        %s1517 = sand.u32 %s137, 1
        %s1518 = scalar_lea.sflag [#allocation4], %s1517
        %s1519 = sand.u32 %s137, 1
        %s1520 = smul.addr %s1519, 64
        %s1521 = scalar_lea.vmem [#allocation10], %s1520
        %s1522 = sand.u32 %s163, 1
        %s1523 = scalar_lea.sflag [#allocation12], %s1522
        %s1524 = sand.u32 %s163, 1
        %s1525 = smul.addr %s1524, 64
        %s1526 = scalar_lea.vmem [#allocation11], %s1525
        // Predicated region
        $region53: #{tpu_custom_call.1} parent=35 // pred_check
          %p1527 = pneg %p147
        $region54: #{tpu_custom_call.1} parent=35 // pred_check_branch
          %1529 = sbr.rel (%p1527) target = $region56
        $region55: #{tpu_custom_call.1} parent=35 // pred_region
          %s1531 = ssub.s32 1024, 1024
          %1532 = vsyncadd %s1518, %s1531
          %s1533 = smul.addr %s30, 8
          %s1534 = smul.addr %s1533, 128
          %s1535 = scalar_lea.hbm %s4, %s1534
          %s1536 = sshll.u32 %s1521, 4
          %s1537 = int_to_ptr.vmem [resolvable:$true] %s1536
          %1542 = dma.vmem_to_hbm [thread:$0]  %s1537, 1024, %s1535, %s1518, 256, 256, 16
        $region56: #{tpu_custom_call.1} parent=35 // pred_fallthru
          _
        // Predicated region
        $region57: #{tpu_custom_call.1} parent=35 // pred_check
          %p1543 = pneg %p173
        $region58: #{tpu_custom_call.1} parent=35 // pred_check_branch
          %1545 = sbr.rel (%p1543) target = $region60
        $region59: #{tpu_custom_call.1} parent=35 // pred_region
          %s1547 = ssub.s32 1024, 1024
          %1548 = vsyncadd %s1523, %s1547
          %s1549 = smul.addr %s30, 8
          %s1550 = smul.addr %s1549, 128
          %s1551 = scalar_lea.hbm %s5, %s1550
          %s1552 = sshll.u32 %s1526, 4
          %s1553 = int_to_ptr.vmem [resolvable:$true] %s1552
          %1558 = dma.vmem_to_hbm [thread:$0]  %s1553, 1024, %s1551, %s1523, 256, 256, 16
        $region60: #{tpu_custom_call.1} parent=35 // pred_fallthru
          _
      $region36: #{tpu_custom_call.1} parent=5 // pred_fallthru
        _
      %p1559 = scmp.le.s32.totalorder 2, %s25
      // Predicated region
      $region61: #{tpu_custom_call.1} parent=5 // pred_check
        %p1560 = pneg %p1559
      $region62: #{tpu_custom_call.1} parent=5 // pred_check_branch
        %1562 = sbr.rel (%p1560) target = $region64
      $region63: #{tpu_custom_call.1} parent=5 // pred_region
        %s1563 = ssub.s32 %s25, 2
        // Predicated region
        $region65: #{tpu_custom_call.1} parent=63 // pred_check
          %p1564 = pneg %p153
        $region66: #{tpu_custom_call.1} parent=63 // pred_check_branch
          %1566 = sbr.rel (%p1564) target = $region68
        $region67: #{tpu_custom_call.1} parent=63 // pred_region
          %s1567 = sand.u32 %s138, 1
          %s1568 = scalar_lea.sflag [#allocation4], %s1567
          %s1569 = sand.u32 %s138, 1
          %s1570 = smul.addr %s1569, 64
          %s1571 = scalar_lea.vmem [#allocation10], %s1570
          %1572 = dma.done %s1568, 1024
        $region68: #{tpu_custom_call.1} parent=63 // pred_fallthru
          _
        // Predicated region
        $region69: #{tpu_custom_call.1} parent=63 // pred_check
          %p1573 = pneg %p179
        $region70: #{tpu_custom_call.1} parent=63 // pred_check_branch
          %1575 = sbr.rel (%p1573) target = $region72
        $region71: #{tpu_custom_call.1} parent=63 // pred_region
          %s1576 = sand.u32 %s164, 1
          %s1577 = scalar_lea.sflag [#allocation12], %s1576
          %s1578 = sand.u32 %s164, 1
          %s1579 = smul.addr %s1578, 64
          %s1580 = scalar_lea.vmem [#allocation11], %s1579
          %1581 = dma.done %s1577, 1024
        $region72: #{tpu_custom_call.1} parent=63 // pred_fallthru
          _
      $region64: #{tpu_custom_call.1} parent=5 // pred_fallthru
        _
    $region6: #{tpu_custom_call.1} parent=1 // loop_footer
      %s29 = sadd.s32 1, %s25
    $region7: #{tpu_custom_call.1} parent=1 // loop_footer_branch
      %24 = sbr.rel target = $region3
    $region8: #{tpu_custom_call.1} parent=1 // loop_exit
      _
    %1582 = vsyncpa [#allocation3], 1
    %s1583 = scalar_lea.sflag [#allocation3], 1
    %1584 = vsyncpa %s1583, 1
    %1585 = vsyncpa [#allocation6], 1
    %s1586 = scalar_lea.sflag [#allocation6], 1
    %1587 = vsyncpa %s1586, 1
    %1588 = vsyncpa [#allocation9], 1
    %1589 = vsyncpa [#allocation4], 1
    %s1590 = scalar_lea.sflag [#allocation4], 1
    %1591 = vsyncpa %s1590, 1
    %1592 = vsyncpa [#allocation12], 1
    %s1593 = scalar_lea.sflag [#allocation12], 1
    %1594 = vsyncpa %s1593, 1

</llo_original>
